<compile_context>
chip_gen: v7x
topology: tpu7x:2x2x1
jax: 0.10.0
libtpu: 0.0.40
codegen_flags: <defaults>
</compile_context>

<pallas_src>
import math
import numpy as np

import jax
import jax.numpy as jnp
from jax.experimental import pallas as pl
from jax.experimental.pallas import tpu as pltpu

# ---------------- config (small, consistent with the module) ----------------
FEATURE_DIM = 32            # args.feature_dim
VERTICE_DIM = 12            # args.vertice_dim (stand-in for 5023*3)
NHEAD = 4
HEAD_DIM = FEATURE_DIM // NHEAD
PERIOD = 8                  # args.period
MAX_SEQ_LEN = 32            # stand-in for 600
N_SUBJECTS = 2              # len(args.train_subjects.split())
AUDIO_DIM = 768             # wav2vec2-base hidden size
FF_DIM = 2 * FEATURE_DIM    # dim_feedforward = 2 * feature_dim
FRAME_NUM = 4
LN_EPS = 1e-5
NEG_INF = -1e30             # finite large-negative: exp underflows to 0, never inf-inf NaN


# ================================ fused Pallas kernel ================================

def _ln(y, g, b):
    mu = jnp.mean(y, axis=-1, keepdims=True)
    var = jnp.mean(jnp.square(y - mu), axis=-1, keepdims=True)
    return (y - mu) * jax.lax.rsqrt(var + LN_EPS) * g + b


def _decoder_kernel(
    # ---- inputs (all VMEM-resident, full-block specs) ----
    audio_ref, onehot_ref, tmpl_ref, ppe_ref, slopes_ref,
    wa_ref, ba_ref, wobj_ref,
    wqkv_ref, bqkv_ref, wo_ref, bo_ref,
    wvc_ref, bvc_ref, woc_ref, boc_ref,
    g1_ref, be1_ref, g2_ref, be2_ref, g3_ref, be3_ref,
    w1_ref, bf1_ref, w2_ref, bf2_ref,
    wr_ref, br_ref, wrm_ref, brm_ref,
    # ---- output ----
    out_ref,
    # ---- VMEM scratch ----
    tok_ref, fb_ref, cross_ref, kc_ref, vc_ref,
):
    E, H, dh = FEATURE_DIM, NHEAD, HEAD_DIM
    f32 = jnp.float32
    frame_num = kc_ref.shape[0]

    # -------- prologue: frame-invariant work (runs exactly once) --------
    style = jnp.dot(onehot_ref[...], wobj_ref[...], preferred_element_type=f32)     # (1, E)
    tok_ref[...] = style                                    # token 0 = style / obj embedding
    fb_ref[...] = brm_ref[...] + style                      # folded feedback bias + style
    hs = jnp.dot(audio_ref[...], wa_ref[...], preferred_element_type=f32) + ba_ref[...]
    # Diagonal-only alignment mask => cross-attn output row i == out_proj(v_proj(mem[i]))
    # (softmax over exactly one unmasked score is 1), so cache all rows once.
    v_mem = jnp.dot(hs, wvc_ref[...], preferred_element_type=f32) + bvc_ref[...]
    cross_ref[...] = jnp.dot(v_mem, woc_ref[...], preferred_element_type=f32) + boc_ref[...]
    kc_ref[...] = jnp.zeros_like(kc_ref)                    # zero the KV cache padding
    vc_ref[...] = jnp.zeros_like(vc_ref)

    # -------- loop-invariant values hoisted out of the frame loop --------
    j = jax.lax.broadcasted_iota(jnp.int32, (1, frame_num), 1)
    slopes = slopes_ref[...]                                # (H, 1)
    tmpl = tmpl_ref[...]                                    # (1, V)
    dn = (((1,), (1,)), ((), ()))

    # -------- autoregressive frame loop (in-kernel; no per-frame grid overhead) --------
    @pl.loop(0, frame_num)
    def _frame(i):
        x_in = tok_ref[...] + ppe_ref[pl.ds(i, 1), :]                                # (1, E)

        # fused QKV projection (1/sqrt(dh) folded into Wq at pack time)
        qkv = jnp.dot(x_in, wqkv_ref[...], preferred_element_type=f32) + bqkv_ref[...]  # (1,3E)
        q = qkv[:, 0:E]
        kc_ref[pl.ds(i, 1), :] = qkv[:, E:2 * E]            # append to K cache
        vc_ref[pl.ds(i, 1), :] = qkv[:, 2 * E:3 * E]        # append to V cache
        kc = kc_ref[...]
        vc = vc_ref[...]                                    # (frame_num, E)

        # per-head scores; feature dim stays on the lane axis
        s = jnp.concatenate(
            [jax.lax.dot_general(q[:, h * dh:(h + 1) * dh], kc[:, h * dh:(h + 1) * dh],
                                 dn, preferred_element_type=f32)
             for h in range(H)],
            axis=0)                                         # (H, frame_num)

        # causal + ALiBi bias generated in-kernel
        rel = (i - j).astype(f32)
        s = s + (-jnp.floor(rel / f32(PERIOD))) * slopes            # ALiBi (per-head slope)
        s = s + jnp.where(j > i, f32(NEG_INF), f32(0.0))            # causal / cache padding

        m = jnp.max(s, axis=-1, keepdims=True)
        p = jnp.exp(s - m)
        p = p * pl.reciprocal(jnp.sum(p, axis=-1, keepdims=True), approx=True)

        attn = jnp.concatenate(
            [jnp.dot(p[h:h + 1, :], vc[:, h * dh:(h + 1) * dh], preferred_element_type=f32)
             for h in range(H)],
            axis=1)                                         # (1, E)
        sa = jnp.dot(attn, wo_ref[...], preferred_element_type=f32) + bo_ref[...]

        # post-norm nn.TransformerDecoderLayer (relu, dropout = eval)
        x1 = _ln(x_in + sa, g1_ref[...], be1_ref[...])
        x2 = _ln(x1 + cross_ref[pl.ds(i, 1), :], g2_ref[...], be2_ref[...])
        hmid = jnp.maximum(jnp.dot(x2, w1_ref[...], preferred_element_type=f32)
                           + bf1_ref[...], 0.0)
        ff = jnp.dot(hmid, w2_ref[...], preferred_element_type=f32) + bf2_ref[...]
        x3 = _ln(x2 + ff, g3_ref[...], be3_ref[...])

        # motion decoder + template add (row i of vertice_out) — off the recurrence path
        v_row = jnp.dot(x3, wr_ref[...], preferred_element_type=f32) + br_ref[...]   # (1, V)
        out_ref[pl.ds(i, 1), :] = v_row + tmpl

        # autoregressive feedback token via fused (E, E) projection wrm = wr @ wm
        tok_ref[...] = jnp.dot(x3, wrm_ref[...], preferred_element_type=f32) + fb_ref[...]


def _full_spec(shape):
    return pl.BlockSpec(shape, lambda i: (0, 0))


def faceformer_forward(params, audio_hidden, template, vertice, one_hot, video):
    """Faceformer.forward (batch=1); decoder fused into a single pallas_call."""
    frame_num = vertice.shape[1]
    if audio_hidden.shape[1] != frame_num:
        raise ValueError("audio hidden states must already be resampled to frame_num")
    E, V = FEATURE_DIM, VERTICE_DIM
    scale = 1.0 / math.sqrt(HEAD_DIM)
    hp = jax.lax.Precision.HIGHEST

    ppe = jnp.asarray(periodic_positional_encoding(FEATURE_DIM, PERIOD, MAX_SEQ_LEN))[:frame_num]
    slopes = jnp.asarray(alibi_slopes(NHEAD)).reshape(NHEAD, 1)

    sa = params["self_attn"]
    ca = params["cross_attn"]
    wqkv = jnp.concatenate([sa["wq"] * scale, sa["wk"], sa["wv"]], axis=1)           # (E, 3E)
    bqkv = jnp.concatenate([sa["bq"] * scale, sa["bk"], sa["bv"]]).reshape(1, 3 * E)
    wa, ba = params["audio_feature_map"]
    w1, b1, w2, b2 = params["ffn"]
    wr, br = params["vertice_map_r"]
    wm, bm = params["vertice_map"]
    # Fuse vertice_map_r -> vertice_map for the autoregressive feedback path:
    #   (x @ wr + br) @ wm + bm  ==  x @ (wr @ wm) + (br @ wm + bm)
    wrm = jnp.dot(wr, wm, precision=hp)                                              # (E, E)
    brm = (jnp.dot(br.reshape(1, V), wm, precision=hp) + bm.reshape(1, E))           # (1, E)
    g1, be1 = params["ln1"]
    g2, be2 = params["ln2"]
    g3, be3 = params["ln3"]

    args = (
        audio_hidden[0].astype(jnp.float32),        # (S, 768)
        one_hot.astype(jnp.float32),                # (1, N_SUBJECTS)
        template.astype(jnp.float32),               # (1, V)
        ppe.astype(jnp.float32),                    # (frame_num, E)
        slopes.astype(jnp.float32),                 # (H, 1)
        wa, ba.reshape(1, E), params["obj_vector"],
        wqkv, bqkv,
        sa["wo"], sa["bo"].reshape(1, E),
        ca["wv"], ca["bv"].reshape(1, E),           # cross-attn q/k unused (diagonal mask)
        ca["wo"], ca["bo"].reshape(1, E),
        g1.reshape(1, E), be1.reshape(1, E),
        g2.reshape(1, E), be2.reshape(1, E),
        g3.reshape(1, E), be3.reshape(1, E),
        w1, b1.reshape(1, FF_DIM), w2, b2.reshape(1, E),
        wr, br.reshape(1, V), wrm, brm,
    )

    vertice_out = pl.pallas_call(
        _decoder_kernel,
        out_shape=jax.ShapeDtypeStruct((frame_num, V), jnp.float32),
        grid=(1,),
        in_specs=[_full_spec(a.shape) for a in args],
        out_specs=pl.BlockSpec((frame_num, V), lambda i: (0, 0)),
        scratch_shapes=[
            pltpu.VMEM((1, E), jnp.float32),             # autoregressive feedback token
            pltpu.VMEM((1, E), jnp.float32),             # folded feedback bias + style
            pltpu.VMEM((frame_num, E), jnp.float32),     # cross-attn rows (loop invariant)
            pltpu.VMEM((frame_num, E), jnp.float32),     # self-attn K cache
            pltpu.VMEM((frame_num, E), jnp.float32),     # self-attn V cache
        ],
        compiler_params=pltpu.CompilerParams(
            dimension_semantics=("arbitrary",)),
    )(*args)

    video_out = video   # TODO(synk): SimoneModel(video, vertice_out) has no reference impl.
    return vertice_out[None], video_out                  # (1, frame_num, V), video


# ============================ host-side constants / params ============================

def alibi_slopes(n_head):
    def get_slopes(n):
        def pow2(n):
            start = 2 ** (-2 ** (-(math.log2(n) - 3)))
            return [start * start ** i for i in range(n)]
        if math.log2(n).is_integer():
            return pow2(n)
        closest = 2 ** math.floor(math.log2(n))
        return pow2(closest) + get_slopes(2 * closest)[0::2][: n - closest]
    return np.asarray(get_slopes(n_head), dtype=np.float32)


def alibi_mask_np(n_head, max_seq_len, period):
    """Original PyTorch-style precomputed mask (used only by the pure-JAX reference)."""
    slopes = alibi_slopes(n_head)
    bias = np.repeat(np.arange(0, max_seq_len, period), period) // period
    bias = -bias[::-1].astype(np.float32)
    alibi = np.zeros((max_seq_len, max_seq_len), dtype=np.float32)
    for i in range(max_seq_len):
        alibi[i, : i + 1] = bias[-(i + 1):]
    alibi = slopes[:, None, None] * alibi[None]
    causal = np.triu(np.ones((max_seq_len, max_seq_len))).T == 1
    causal_f = np.where(causal, 0.0, -np.inf).astype(np.float32)
    return jnp.asarray(causal_f[None] + alibi)            # (n_head, L, L)


def periodic_positional_encoding(d_model, period, max_seq_len):
    enc = np.zeros((period, d_model), dtype=np.float32)
    pos = np.arange(period, dtype=np.float32)[:, None]
    inside = np.exp(np.arange(0, d_model, 2, dtype=np.float32) * (-math.log(10000.0) / d_model))
    enc[:, 0::2] = np.sin(pos * inside)
    enc[:, 1::2] = np.cos(pos * inside)
    return np.tile(enc, (max_seq_len // period + 1, 1))


def init_params(key, zero_vertice_map_r=True):
    E, V, F = FEATURE_DIM, VERTICE_DIM, FF_DIM

    def dense(k, fan_in, fan_out):
        kw, kb = jax.random.split(k)
        return (0.05 * jax.random.normal(kw, (fan_in, fan_out), jnp.float32),
                0.05 * jax.random.normal(kb, (fan_out,), jnp.float32))

    keys = jax.random.split(key, 12)

    def attn_params(k):
        ks = jax.random.split(k, 4)
        wq, bq = dense(ks[0], E, E)
        wk, bk = dense(ks[1], E, E)
        wv, bv = dense(ks[2], E, E)
        wo, bo = dense(ks[3], E, E)
        return dict(wq=wq, bq=bq, wk=wk, bk=bk, wv=wv, bv=bv, wo=wo, bo=bo)

    if zero_vertice_map_r:   # faithful to nn.init.constant_(vertice_map_r, 0)
        wr, br = jnp.zeros((E, V), jnp.float32), jnp.zeros((V,), jnp.float32)
    else:
        wr, br = dense(keys[8], E, V)

    return dict(
        audio_feature_map=dense(keys[0], AUDIO_DIM, E),
        vertice_map=dense(keys[1], V, E),
        vertice_map_r=(wr, br),
        obj_vector=0.05 * jax.random.normal(keys[2], (N_SUBJECTS, E), jnp.float32),  # bias=False
        self_attn=attn_params(keys[3]),
        cross_attn=attn_params(keys[4]),
        ffn=dense(keys[6], E, F) + dense(keys[7], F, E),      # (w1, b1, w2, b2)
        ln1=(jnp.ones((E,), jnp.float32), jnp.zeros((E,), jnp.float32)),
        ln2=(jnp.ones((E,), jnp.float32), jnp.zeros((E,), jnp.float32)),
        ln3=(jnp.ones((E,), jnp.float32), jnp.zeros((E,), jnp.float32)),
    )


# ============================ pure-JAX reference (validation only) ============================

_HP = jax.lax.Precision.HIGHEST


def _dot(a, b):
    return jnp.dot(a, b, precision=_HP)


def _mha_ref(xq, xkv, p, add_mask):
    T, E = xq.shape
    S = xkv.shape[0]
    H, dh = NHEAD, HEAD_DIM
    q = _dot(xq, p["wq"]) + p["bq"]
    k = _dot(xkv, p["wk"]) + p["bk"]
    v = _dot(xkv, p["wv"]) + p["bv"]
    qh = q.reshape(T, H, dh).transpose(1, 0, 2)
    kh = k.reshape(S, H, dh).transpose(1, 0, 2)
    vh = v.reshape(S, H, dh).transpose(1, 0, 2)
    s = jnp.einsum("htd,hsd->hts", qh, kh, precision=_HP) / math.sqrt(dh) + add_mask
    pr = jax.nn.softmax(s, axis=-1)
    o = jnp.einsum("hts,hsd->htd", pr, vh, precision=_HP).transpose(1, 0, 2).reshape(T, E)
    return _dot(o, p["wo"]) + p["bo"]


def _decoder_layer_ref(tgt, memory, params, tgt_mask, mem_mask):
    sa = _mha_ref(tgt, tgt, params["self_attn"], tgt_mask)
    x = _ln(tgt + sa, *params["ln1"])
    ca = _mha_ref(x, memory, params["cross_attn"], mem_mask)
    x = _ln(x + ca, *params["ln2"])
    w1, b1, w2, b2 = params["ffn"]
    ff = _dot(jnp.maximum(_dot(x, w1) + b1, 0.0), w2) + b2
    return _ln(x + ff, *params["ln3"])


def faceformer_reference(params, audio_hidden, template, vertice, one_hot, biased_mask, ppe):
    """Step-by-step full recompute matching the PyTorch module (no KV cache)."""
    frame_num = vertice.shape[1]
    wa, ba = params["audio_feature_map"]
    hs = _dot(audio_hidden[0], wa) + ba
    S = hs.shape[0]
    obj = _dot(one_hot, params["obj_vector"])
    wr, br = params["vertice_map_r"]
    wm, bm = params["vertice_map"]
    vertice_emb = obj
    style = obj
    vo = None
    for i in range(frame_num):
        T = vertice_emb.shape[0]
        x = vertice_emb + ppe[:T]
        tgt_mask = biased_mask[:, :T, :T]
        mem = np.full((T, S), -np.inf, dtype=np.float32)
        mem[np.arange(T), np.arange(T)] = 0.0
        mem_mask = jnp.asarray(np.broadcast_to(mem, (NHEAD, T, S)))
        dec = _decoder_layer_ref(x, hs, params, tgt_mask, mem_mask)
        vo = _dot(dec, wr) + br
        new = _dot(vo[-1:], wm) + bm + style
        vertice_emb = jnp.concatenate([vertice_emb, new], axis=0)
    return (vo + template)[None]


# ==================================== main ====================================

if __name__ == "__main__":
    key = jax.random.PRNGKey(0)
    k_par, k_aud, k_tpl, k_vid = jax.random.split(key, 4)

    # Non-zero vertice_map_r so the autoregressive feedback path is exercised numerically
    # (the module's zero-init makes new_output == style_emb every step).
    params = init_params(k_par, zero_vertice_map_r=False)

    audio_hidden = 0.1 * jax.random.normal(k_aud, (1, FRAME_NUM, AUDIO_DIM), jnp.float32)
    template = 0.1 * jax.random.normal(k_tpl, (1, VERTICE_DIM), jnp.float32)
    vertice = jnp.zeros((1, FRAME_NUM, VERTICE_DIM), jnp.float32)   # only frame_num is used
    one_hot = jnp.zeros((1, N_SUBJECTS), jnp.float32).at[0, 0].set(1.0)
    video = 0.1 * jax.random.normal(k_vid, (1, 3, 8, 8), jnp.float32)

    fwd = jax.jit(faceformer_forward)
    vertice_out, video_out = fwd(params, audio_hidden, template, vertice, one_hot, video)
    jax.block_until_ready(vertice_out)
    jax.block_until_ready(video_out)

    assert vertice_out.shape == (1, FRAME_NUM, VERTICE_DIM)
    assert bool(jnp.all(jnp.isfinite(vertice_out)))

    # Cross-check the fused/KV-cached kernel against a faithful full-recompute reference.
    biased_mask = alibi_mask_np(NHEAD, MAX_SEQ_LEN, PERIOD)
    ppe_tab = jnp.asarray(periodic_positional_encoding(FEATURE_DIM, PERIOD, MAX_SEQ_LEN))
    ref = faceformer_reference(params, audio_hidden, template, vertice, one_hot,
                               biased_mask, ppe_tab)
    err = float(jnp.max(jnp.abs(vertice_out - ref)))
    assert err < 2e-2, f"mismatch vs reference: max abs err = {err}"

    print("KERNEL_OK")
</pallas_src>

<mosaic_0001>
module attributes {stable_mosaic.version = 11 : i64} {
  func.func @_decoder_kernel(%arg0: i32, %arg1: memref<4x768xf32, #tpu.memory_space<vmem>>, %arg2: memref<1x2xf32, #tpu.memory_space<vmem>>, %arg3: memref<1x12xf32, #tpu.memory_space<vmem>>, %arg4: memref<4x32xf32, #tpu.memory_space<vmem>>, %arg5: memref<4x1xf32, #tpu.memory_space<vmem>>, %arg6: memref<768x32xf32, #tpu.memory_space<vmem>>, %arg7: memref<1x32xf32, #tpu.memory_space<vmem>>, %arg8: memref<2x32xf32, #tpu.memory_space<vmem>>, %arg9: memref<32x96xf32, #tpu.memory_space<vmem>>, %arg10: memref<1x96xf32, #tpu.memory_space<vmem>>, %arg11: memref<32x32xf32, #tpu.memory_space<vmem>>, %arg12: memref<1x32xf32, #tpu.memory_space<vmem>>, %arg13: memref<32x32xf32, #tpu.memory_space<vmem>>, %arg14: memref<1x32xf32, #tpu.memory_space<vmem>>, %arg15: memref<32x32xf32, #tpu.memory_space<vmem>>, %arg16: memref<1x32xf32, #tpu.memory_space<vmem>>, %arg17: memref<1x32xf32, #tpu.memory_space<vmem>>, %arg18: memref<1x32xf32, #tpu.memory_space<vmem>>, %arg19: memref<1x32xf32, #tpu.memory_space<vmem>>, %arg20: memref<1x32xf32, #tpu.memory_space<vmem>>, %arg21: memref<1x32xf32, #tpu.memory_space<vmem>>, %arg22: memref<1x32xf32, #tpu.memory_space<vmem>>, %arg23: memref<32x64xf32, #tpu.memory_space<vmem>>, %arg24: memref<1x64xf32, #tpu.memory_space<vmem>>, %arg25: memref<64x32xf32, #tpu.memory_space<vmem>>, %arg26: memref<1x32xf32, #tpu.memory_space<vmem>>, %arg27: memref<32x12xf32, #tpu.memory_space<vmem>>, %arg28: memref<1x12xf32, #tpu.memory_space<vmem>>, %arg29: memref<32x32xf32, #tpu.memory_space<vmem>>, %arg30: memref<1x32xf32, #tpu.memory_space<vmem>>, %arg31: memref<4x12xf32, #tpu.memory_space<vmem>>, %arg32: memref<1x32xf32, #tpu.memory_space<vmem>>, %arg33: memref<1x32xf32, #tpu.memory_space<vmem>>, %arg34: memref<4x32xf32, #tpu.memory_space<vmem>>, %arg35: memref<4x32xf32, #tpu.memory_space<vmem>>, %arg36: memref<4x32xf32, #tpu.memory_space<vmem>>) attributes {dimension_semantics = [#tpu.dimension_semantics<arbitrary>], iteration_bounds = array<i64: 1>, scalar_prefetch = 0 : i64, scratch_operands = 5 : i64, tpu.core_type = #tpu.core_type<tc>, window_params = [{pipeline_mode = #tpu.pipeline_mode<synchronous>, transform_indices = @transform_0, window_bounds = array<i64: 4, 768>}, {pipeline_mode = #tpu.pipeline_mode<synchronous>, transform_indices = @transform_1, window_bounds = array<i64: 1, 2>}, {pipeline_mode = #tpu.pipeline_mode<synchronous>, transform_indices = @transform_2, window_bounds = array<i64: 1, 12>}, {pipeline_mode = #tpu.pipeline_mode<synchronous>, transform_indices = @transform_3, window_bounds = array<i64: 4, 32>}, {pipeline_mode = #tpu.pipeline_mode<synchronous>, transform_indices = @transform_4, window_bounds = array<i64: 4, 1>}, {pipeline_mode = #tpu.pipeline_mode<synchronous>, transform_indices = @transform_5, window_bounds = array<i64: 768, 32>}, {pipeline_mode = #tpu.pipeline_mode<synchronous>, transform_indices = @transform_6, window_bounds = array<i64: 1, 32>}, {pipeline_mode = #tpu.pipeline_mode<synchronous>, transform_indices = @transform_7, window_bounds = array<i64: 2, 32>}, {pipeline_mode = #tpu.pipeline_mode<synchronous>, transform_indices = @transform_8, window_bounds = array<i64: 32, 96>}, {pipeline_mode = #tpu.pipeline_mode<synchronous>, transform_indices = @transform_9, window_bounds = array<i64: 1, 96>}, {pipeline_mode = #tpu.pipeline_mode<synchronous>, transform_indices = @transform_10, window_bounds = array<i64: 32, 32>}, {pipeline_mode = #tpu.pipeline_mode<synchronous>, transform_indices = @transform_11, window_bounds = array<i64: 1, 32>}, {pipeline_mode = #tpu.pipeline_mode<synchronous>, transform_indices = @transform_12, window_bounds = array<i64: 32, 32>}, {pipeline_mode = #tpu.pipeline_mode<synchronous>, transform_indices = @transform_13, window_bounds = array<i64: 1, 32>}, {pipeline_mode = #tpu.pipeline_mode<synchronous>, transform_indices = @transform_14, window_bounds = array<i64: 32, 32>}, {pipeline_mode = #tpu.pipeline_mode<synchronous>, transform_indices = @transform_15, window_bounds = array<i64: 1, 32>}, {pipeline_mode = #tpu.pipeline_mode<synchronous>, transform_indices = @transform_16, window_bounds = array<i64: 1, 32>}, {pipeline_mode = #tpu.pipeline_mode<synchronous>, transform_indices = @transform_17, window_bounds = array<i64: 1, 32>}, {pipeline_mode = #tpu.pipeline_mode<synchronous>, transform_indices = @transform_18, window_bounds = array<i64: 1, 32>}, {pipeline_mode = #tpu.pipeline_mode<synchronous>, transform_indices = @transform_19, window_bounds = array<i64: 1, 32>}, {pipeline_mode = #tpu.pipeline_mode<synchronous>, transform_indices = @transform_20, window_bounds = array<i64: 1, 32>}, {pipeline_mode = #tpu.pipeline_mode<synchronous>, transform_indices = @transform_21, window_bounds = array<i64: 1, 32>}, {pipeline_mode = #tpu.pipeline_mode<synchronous>, transform_indices = @transform_22, window_bounds = array<i64: 32, 64>}, {pipeline_mode = #tpu.pipeline_mode<synchronous>, transform_indices = @transform_23, window_bounds = array<i64: 1, 64>}, {pipeline_mode = #tpu.pipeline_mode<synchronous>, transform_indices = @transform_24, window_bounds = array<i64: 64, 32>}, {pipeline_mode = #tpu.pipeline_mode<synchronous>, transform_indices = @transform_25, window_bounds = array<i64: 1, 32>}, {pipeline_mode = #tpu.pipeline_mode<synchronous>, transform_indices = @transform_26, window_bounds = array<i64: 32, 12>}, {pipeline_mode = #tpu.pipeline_mode<synchronous>, transform_indices = @transform_27, window_bounds = array<i64: 1, 12>}, {pipeline_mode = #tpu.pipeline_mode<synchronous>, transform_indices = @transform_28, window_bounds = array<i64: 32, 32>}, {pipeline_mode = #tpu.pipeline_mode<synchronous>, transform_indices = @transform_29, window_bounds = array<i64: 1, 32>}, {pipeline_mode = #tpu.pipeline_mode<synchronous>, transform_indices = @transform_30, window_bounds = array<i64: 4, 12>}]} {
    %c0 = arith.constant 0 : index
    %c0_0 = arith.constant 0 : index
    %0 = vector.load %arg2[%c0, %c0_0] : memref<1x2xf32, #tpu.memory_space<vmem>>, vector<1x2xf32>
    %c0_1 = arith.constant 0 : index
    %c0_2 = arith.constant 0 : index
    %1 = vector.load %arg8[%c0_1, %c0_2] : memref<2x32xf32, #tpu.memory_space<vmem>>, vector<2x32xf32>
    %cst = arith.constant dense<0.000000e+00> : vector<1x32xf32>
    %2 = tpu.matmul %0, %1, %cst {dimension_numbers = #tpu.dot_dimension_numbers<[1], [0], [0], [1], [0, 0, 1, 1], [], []>} : vector<1x2xf32>, vector<2x32xf32>, vector<1x32xf32> -> vector<1x32xf32>
    %c0_3 = arith.constant 0 : index
    %c0_4 = arith.constant 0 : index
    %3 = vector.load %arg32[%c0_3, %c0_4] : memref<1x32xf32, #tpu.memory_space<vmem>>, vector<1x32xf32>
    tpu.vector_store %arg32[%c0_3, %c0_4], %2 {strides = array<i32>} : memref<1x32xf32, #tpu.memory_space<vmem>>, vector<1x32xf32>,
    %c0_5 = arith.constant 0 : index
    %c0_6 = arith.constant 0 : index
    %4 = vector.load %arg30[%c0_5, %c0_6] : memref<1x32xf32, #tpu.memory_space<vmem>>, vector<1x32xf32>
    %5 = arith.addf %4, %2 : vector<1x32xf32>
    %c0_7 = arith.constant 0 : index
    %c0_8 = arith.constant 0 : index
    %6 = vector.load %arg33[%c0_7, %c0_8] : memref<1x32xf32, #tpu.memory_space<vmem>>, vector<1x32xf32>
    tpu.vector_store %arg33[%c0_7, %c0_8], %5 {strides = array<i32>} : memref<1x32xf32, #tpu.memory_space<vmem>>, vector<1x32xf32>,
    %c0_9 = arith.constant 0 : index
    %c0_10 = arith.constant 0 : index
    %7 = vector.load %arg1[%c0_9, %c0_10] : memref<4x768xf32, #tpu.memory_space<vmem>>, vector<4x768xf32>
    %c0_11 = arith.constant 0 : index
    %c0_12 = arith.constant 0 : index
    %8 = vector.load %arg6[%c0_11, %c0_12] : memref<768x32xf32, #tpu.memory_space<vmem>>, vector<768x32xf32>
    %cst_13 = arith.constant dense<0.000000e+00> : vector<4x32xf32>
    %9 = tpu.matmul %7, %8, %cst_13 {dimension_numbers = #tpu.dot_dimension_numbers<[1], [0], [0], [1], [0, 0, 1, 1], [], []>} : vector<4x768xf32>, vector<768x32xf32>, vector<4x32xf32> -> vector<4x32xf32>
    %c0_14 = arith.constant 0 : index
    %c0_15 = arith.constant 0 : index
    %10 = vector.load %arg7[%c0_14, %c0_15] : memref<1x32xf32, #tpu.memory_space<vmem>>, vector<1x32xf32>
    %11 = vector.broadcast %10 : vector<1x32xf32> to vector<4x32xf32>
    %12 = arith.addf %9, %11 : vector<4x32xf32>
    %c0_16 = arith.constant 0 : index
    %c0_17 = arith.constant 0 : index
    %13 = vector.load %arg13[%c0_16, %c0_17] : memref<32x32xf32, #tpu.memory_space<vmem>>, vector<32x32xf32>
    %cst_18 = arith.constant dense<0.000000e+00> : vector<4x32xf32>
    %14 = tpu.matmul %12, %13, %cst_18 {dimension_numbers = #tpu.dot_dimension_numbers<[1], [0], [0], [1], [0, 0, 1, 1], [], []>} : vector<4x32xf32>, vector<32x32xf32>, vector<4x32xf32> -> vector<4x32xf32>
    %c0_19 = arith.constant 0 : index
    %c0_20 = arith.constant 0 : index
    %15 = vector.load %arg14[%c0_19, %c0_20] : memref<1x32xf32, #tpu.memory_space<vmem>>, vector<1x32xf32>
    %16 = vector.broadcast %15 : vector<1x32xf32> to vector<4x32xf32>
    %17 = arith.addf %14, %16 : vector<4x32xf32>
    %c0_21 = arith.constant 0 : index
    %c0_22 = arith.constant 0 : index
    %18 = vector.load %arg15[%c0_21, %c0_22] : memref<32x32xf32, #tpu.memory_space<vmem>>, vector<32x32xf32>
    %cst_23 = arith.constant dense<0.000000e+00> : vector<4x32xf32>
    %19 = tpu.matmul %17, %18, %cst_23 {dimension_numbers = #tpu.dot_dimension_numbers<[1], [0], [0], [1], [0, 0, 1, 1], [], []>} : vector<4x32xf32>, vector<32x32xf32>, vector<4x32xf32> -> vector<4x32xf32>
    %c0_24 = arith.constant 0 : index
    %c0_25 = arith.constant 0 : index
    %20 = vector.load %arg16[%c0_24, %c0_25] : memref<1x32xf32, #tpu.memory_space<vmem>>, vector<1x32xf32>
    %21 = vector.broadcast %20 : vector<1x32xf32> to vector<4x32xf32>
    %22 = arith.addf %19, %21 : vector<4x32xf32>
    %c0_26 = arith.constant 0 : index
    %c0_27 = arith.constant 0 : index
    %23 = vector.load %arg34[%c0_26, %c0_27] : memref<4x32xf32, #tpu.memory_space<vmem>>, vector<4x32xf32>
    tpu.vector_store %arg34[%c0_26, %c0_27], %22 {strides = array<i32>} : memref<4x32xf32, #tpu.memory_space<vmem>>, vector<4x32xf32>,
    %cst_28 = arith.constant 0.000000e+00 : f32
    %24 = vector.broadcast %cst_28 : f32 to vector<4x32xf32>
    %c0_29 = arith.constant 0 : index
    %c0_30 = arith.constant 0 : index
    %25 = vector.load %arg35[%c0_29, %c0_30] : memref<4x32xf32, #tpu.memory_space<vmem>>, vector<4x32xf32>
    tpu.vector_store %arg35[%c0_29, %c0_30], %24 {strides = array<i32>} : memref<4x32xf32, #tpu.memory_space<vmem>>, vector<4x32xf32>,
    %cst_31 = arith.constant 0.000000e+00 : f32
    %26 = vector.broadcast %cst_31 : f32 to vector<4x32xf32>
    %c0_32 = arith.constant 0 : index
    %c0_33 = arith.constant 0 : index
    %27 = vector.load %arg36[%c0_32, %c0_33] : memref<4x32xf32, #tpu.memory_space<vmem>>, vector<4x32xf32>
    tpu.vector_store %arg36[%c0_32, %c0_33], %26 {strides = array<i32>} : memref<4x32xf32, #tpu.memory_space<vmem>>, vector<4x32xf32>,
    %28 = tpu.iota {dimensions = array<i32: 1>} : vector<1x4xi32>
    %c0_34 = arith.constant 0 : index
    %c0_35 = arith.constant 0 : index
    %29 = vector.load %arg5[%c0_34, %c0_35] : memref<4x1xf32, #tpu.memory_space<vmem>>, vector<4x1xf32>
    %c0_36 = arith.constant 0 : index
    %c0_37 = arith.constant 0 : index
    %30 = vector.load %arg3[%c0_36, %c0_37] : memref<1x12xf32, #tpu.memory_space<vmem>>, vector<1x12xf32>
    %c0_i32 = arith.constant 0 : i32
    %c4_i32 = arith.constant 4 : i32
    %31 = arith.addi %c0_i32, %c4_i32 : i32
    %c1_i32 = arith.constant 1 : i32
    scf.for %arg37 = %c0_i32 to %31 step %c1_i32  : i32 {
      %c1_i32_39 = arith.constant 1 : i32
      %32 = arith.muli %arg37, %c1_i32_39 : i32
      %c0_i32_40 = arith.constant 0 : i32
      %33 = arith.addi %c0_i32_40, %32 : i32
      %c0_41 = arith.constant 0 : index
      %c0_42 = arith.constant 0 : index
      %34 = vector.load %arg32[%c0_41, %c0_42] : memref<1x32xf32, #tpu.memory_space<vmem>>, vector<1x32xf32>
      %35 = arith.index_cast %33 : i32 to index
      %c0_43 = arith.constant 0 : index
      %36 = vector.load %arg4[%35, %c0_43] : memref<4x32xf32, #tpu.memory_space<vmem>>, vector<1x32xf32>
      %37 = arith.addf %34, %36 : vector<1x32xf32>
      %c0_44 = arith.constant 0 : index
      %c0_45 = arith.constant 0 : index
      %38 = vector.load %arg9[%c0_44, %c0_45] : memref<32x96xf32, #tpu.memory_space<vmem>>, vector<32x96xf32>
      %cst_46 = arith.constant dense<0.000000e+00> : vector<1x96xf32>
      %39 = tpu.matmul %37, %38, %cst_46 {dimension_numbers = #tpu.dot_dimension_numbers<[1], [0], [0], [1], [0, 0, 1, 1], [], []>} : vector<1x32xf32>, vector<32x96xf32>, vector<1x96xf32> -> vector<1x96xf32>
      %c0_47 = arith.constant 0 : index
      %c0_48 = arith.constant 0 : index
      %40 = vector.load %arg10[%c0_47, %c0_48] : memref<1x96xf32, #tpu.memory_space<vmem>>, vector<1x96xf32>
      %41 = arith.addf %39, %40 : vector<1x96xf32>
      %42 = vector.extract_strided_slice %41 {offsets = [0, 0], sizes = [1, 32], strides = [1, 1]} : vector<1x96xf32> to vector<1x32xf32>
      %43 = vector.extract_strided_slice %41 {offsets = [0, 32], sizes = [1, 32], strides = [1, 1]} : vector<1x96xf32> to vector<1x32xf32>
      %44 = arith.index_cast %33 : i32 to index
      %c0_49 = arith.constant 0 : index
      %45 = vector.load %arg35[%44, %c0_49] : memref<4x32xf32, #tpu.memory_space<vmem>>, vector<1x32xf32>
      tpu.vector_store %arg35[%44, %c0_49], %43 {strides = array<i32>} : memref<4x32xf32, #tpu.memory_space<vmem>>, vector<1x32xf32>,
      %46 = vector.extract_strided_slice %41 {offsets = [0, 64], sizes = [1, 32], strides = [1, 1]} : vector<1x96xf32> to vector<1x32xf32>
      %47 = arith.index_cast %33 : i32 to index
      %c0_50 = arith.constant 0 : index
      %48 = vector.load %arg36[%47, %c0_50] : memref<4x32xf32, #tpu.memory_space<vmem>>, vector<1x32xf32>
      tpu.vector_store %arg36[%47, %c0_50], %46 {strides = array<i32>} : memref<4x32xf32, #tpu.memory_space<vmem>>, vector<1x32xf32>,
      %c0_51 = arith.constant 0 : index
      %c0_52 = arith.constant 0 : index
      %49 = vector.load %arg35[%c0_51, %c0_52] : memref<4x32xf32, #tpu.memory_space<vmem>>, vector<4x32xf32>
      %c0_53 = arith.constant 0 : index
      %c0_54 = arith.constant 0 : index
      %50 = vector.load %arg36[%c0_53, %c0_54] : memref<4x32xf32, #tpu.memory_space<vmem>>, vector<4x32xf32>
      %51 = vector.extract_strided_slice %42 {offsets = [0, 0], sizes = [1, 8], strides = [1, 1]} : vector<1x32xf32> to vector<1x8xf32>
      %52 = vector.extract_strided_slice %49 {offsets = [0, 0], sizes = [4, 8], strides = [1, 1]} : vector<4x32xf32> to vector<4x8xf32>
      %cst_55 = arith.constant dense<0.000000e+00> : vector<1x4xf32>
      %53 = tpu.matmul %51, %52, %cst_55 {dimension_numbers = #tpu.dot_dimension_numbers<[1], [1], [0], [0], [0, 0, 1, 0], [], []>} : vector<1x8xf32>, vector<4x8xf32>, vector<1x4xf32> -> vector<1x4xf32>
      %54 = vector.extract_strided_slice %42 {offsets = [0, 8], sizes = [1, 8], strides = [1, 1]} : vector<1x32xf32> to vector<1x8xf32>
      %55 = vector.extract_strided_slice %49 {offsets = [0, 8], sizes = [4, 8], strides = [1, 1]} : vector<4x32xf32> to vector<4x8xf32>
      %cst_56 = arith.constant dense<0.000000e+00> : vector<1x4xf32>
      %56 = tpu.matmul %54, %55, %cst_56 {dimension_numbers = #tpu.dot_dimension_numbers<[1], [1], [0], [0], [0, 0, 1, 0], [], []>} : vector<1x8xf32>, vector<4x8xf32>, vector<1x4xf32> -> vector<1x4xf32>
      %57 = vector.extract_strided_slice %42 {offsets = [0, 16], sizes = [1, 8], strides = [1, 1]} : vector<1x32xf32> to vector<1x8xf32>
      %58 = vector.extract_strided_slice %49 {offsets = [0, 16], sizes = [4, 8], strides = [1, 1]} : vector<4x32xf32> to vector<4x8xf32>
      %cst_57 = arith.constant dense<0.000000e+00> : vector<1x4xf32>
      %59 = tpu.matmul %57, %58, %cst_57 {dimension_numbers = #tpu.dot_dimension_numbers<[1], [1], [0], [0], [0, 0, 1, 0], [], []>} : vector<1x8xf32>, vector<4x8xf32>, vector<1x4xf32> -> vector<1x4xf32>
      %60 = vector.extract_strided_slice %42 {offsets = [0, 24], sizes = [1, 8], strides = [1, 1]} : vector<1x32xf32> to vector<1x8xf32>
      %61 = vector.extract_strided_slice %49 {offsets = [0, 24], sizes = [4, 8], strides = [1, 1]} : vector<4x32xf32> to vector<4x8xf32>
      %cst_58 = arith.constant dense<0.000000e+00> : vector<1x4xf32>
      %62 = tpu.matmul %60, %61, %cst_58 {dimension_numbers = #tpu.dot_dimension_numbers<[1], [1], [0], [0], [0, 0, 1, 0], [], []>} : vector<1x8xf32>, vector<4x8xf32>, vector<1x4xf32> -> vector<1x4xf32>
      %63 = tpu.concatenate %53, %56, %59, %62 in 0 : vector<1x4xf32>, vector<1x4xf32>, vector<1x4xf32>, vector<1x4xf32> -> vector<4x4xf32>
      %64 = vector.broadcast %33 : i32 to vector<1x4xi32>
      %65 = arith.subi %64, %28 : vector<1x4xi32>
      %66 = arith.sitofp %65 : vector<1x4xi32> to vector<1x4xf32>
      %cst_59 = arith.constant 8.000000e+00 : f32
      %67 = vector.broadcast %cst_59 : f32 to vector<1x4xf32>
      %68 = arith.divf %66, %67 : vector<1x4xf32>
      %69 = math.floor %68 : vector<1x4xf32>
      %cst_60 = arith.constant 0.000000e+00 : f32
      %70 = vector.broadcast %cst_60 : f32 to vector<1x4xf32>
      %71 = arith.subf %70, %69 : vector<1x4xf32>
      %72 = vector.broadcast %71 : vector<1x4xf32> to vector<4x4xf32>
      %73 = vector.broadcast %29 : vector<4x1xf32> to vector<4x4xf32>
      %74 = arith.mulf %72, %73 : vector<4x4xf32>
      %75 = arith.addf %63, %74 : vector<4x4xf32>
      %76 = vector.broadcast %33 : i32 to vector<1x4xi32>
      %77 = arith.cmpi sgt, %28, %76 : vector<1x4xi32>
      %cst_61 = arith.constant -1.000000e+30 : f32
      %cst_62 = arith.constant 0.000000e+00 : f32
      %78 = vector.broadcast %cst_61 : f32 to vector<1x4xf32>
      %79 = vector.broadcast %cst_62 : f32 to vector<1x4xf32>
      %80 = arith.select %77, %78, %79 : vector<1x4xi1>, vector<1x4xf32>
      %81 = vector.broadcast %80 : vector<1x4xf32> to vector<4x4xf32>
      %82 = arith.addf %75, %81 : vector<4x4xf32>
      %cst_63 = arith.constant dense<0xFF800000> : vector<4xf32>
      %83 = vector.multi_reduction <maximumf>, %82, %cst_63 [1] : vector<4x4xf32> to vector<4xf32>
      %84 = vector.shape_cast %83 : vector<4xf32> to vector<4x1xf32>
      %85 = vector.broadcast %84 : vector<4x1xf32> to vector<4x4xf32>
      %86 = arith.subf %82, %85 : vector<4x4xf32>
      %87 = math.exp %86 : vector<4x4xf32>
      %cst_64 = arith.constant dense<0.000000e+00> : vector<4xf32>
      %88 = vector.multi_reduction <add>, %87, %cst_64 [1] : vector<4x4xf32> to vector<4xf32>
      %89 = vector.shape_cast %88 : vector<4xf32> to vector<4x1xf32>
      %90 = tpu.reciprocal %89 {approx = true} : vector<4x1xf32> -> vector<4x1xf32>
      %91 = vector.broadcast %90 : vector<4x1xf32> to vector<4x4xf32>
      %92 = arith.mulf %87, %91 : vector<4x4xf32>
      %93 = vector.extract_strided_slice %92 {offsets = [0, 0], sizes = [1, 4], strides = [1, 1]} : vector<4x4xf32> to vector<1x4xf32>
      %94 = vector.extract_strided_slice %50 {offsets = [0, 0], sizes = [4, 8], strides = [1, 1]} : vector<4x32xf32> to vector<4x8xf32>
      %cst_65 = arith.constant dense<0.000000e+00> : vector<1x8xf32>
      %95 = tpu.matmul %93, %94, %cst_65 {dimension_numbers = #tpu.dot_dimension_numbers<[1], [0], [0], [1], [0, 0, 1, 1], [], []>} : vector<1x4xf32>, vector<4x8xf32>, vector<1x8xf32> -> vector<1x8xf32>
      %96 = vector.extract_strided_slice %92 {offsets = [1, 0], sizes = [1, 4], strides = [1, 1]} : vector<4x4xf32> to vector<1x4xf32>
      %97 = vector.extract_strided_slice %50 {offsets = [0, 8], sizes = [4, 8], strides = [1, 1]} : vector<4x32xf32> to vector<4x8xf32>
      %cst_66 = arith.constant dense<0.000000e+00> : vector<1x8xf32>
      %98 = tpu.matmul %96, %97, %cst_66 {dimension_numbers = #tpu.dot_dimension_numbers<[1], [0], [0], [1], [0, 0, 1, 1], [], []>} : vector<1x4xf32>, vector<4x8xf32>, vector<1x8xf32> -> vector<1x8xf32>
      %99 = vector.extract_strided_slice %92 {offsets = [2, 0], sizes = [1, 4], strides = [1, 1]} : vector<4x4xf32> to vector<1x4xf32>
      %100 = vector.extract_strided_slice %50 {offsets = [0, 16], sizes = [4, 8], strides = [1, 1]} : vector<4x32xf32> to vector<4x8xf32>
      %cst_67 = arith.constant dense<0.000000e+00> : vector<1x8xf32>
      %101 = tpu.matmul %99, %100, %cst_67 {dimension_numbers = #tpu.dot_dimension_numbers<[1], [0], [0], [1], [0, 0, 1, 1], [], []>} : vector<1x4xf32>, vector<4x8xf32>, vector<1x8xf32> -> vector<1x8xf32>
      %102 = vector.extract_strided_slice %92 {offsets = [3, 0], sizes = [1, 4], strides = [1, 1]} : vector<4x4xf32> to vector<1x4xf32>
      %103 = vector.extract_strided_slice %50 {offsets = [0, 24], sizes = [4, 8], strides = [1, 1]} : vector<4x32xf32> to vector<4x8xf32>
      %cst_68 = arith.constant dense<0.000000e+00> : vector<1x8xf32>
      %104 = tpu.matmul %102, %103, %cst_68 {dimension_numbers = #tpu.dot_dimension_numbers<[1], [0], [0], [1], [0, 0, 1, 1], [], []>} : vector<1x4xf32>, vector<4x8xf32>, vector<1x8xf32> -> vector<1x8xf32>
      %105 = tpu.concatenate %95, %98, %101, %104 in 1 : vector<1x8xf32>, vector<1x8xf32>, vector<1x8xf32>, vector<1x8xf32> -> vector<1x32xf32>
      %c0_69 = arith.constant 0 : index
      %c0_70 = arith.constant 0 : index
      %106 = vector.load %arg11[%c0_69, %c0_70] : memref<32x32xf32, #tpu.memory_space<vmem>>, vector<32x32xf32>
      %cst_71 = arith.constant dense<0.000000e+00> : vector<1x32xf32>
      %107 = tpu.matmul %105, %106, %cst_71 {dimension_numbers = #tpu.dot_dimension_numbers<[1], [0], [0], [1], [0, 0, 1, 1], [], []>} : vector<1x32xf32>, vector<32x32xf32>, vector<1x32xf32> -> vector<1x32xf32>
      %c0_72 = arith.constant 0 : index
      %c0_73 = arith.constant 0 : index
      %108 = vector.load %arg12[%c0_72, %c0_73] : memref<1x32xf32, #tpu.memory_space<vmem>>, vector<1x32xf32>
      %109 = arith.addf %107, %108 : vector<1x32xf32>
      %110 = arith.addf %37, %109 : vector<1x32xf32>
      %c0_74 = arith.constant 0 : index
      %c0_75 = arith.constant 0 : index
      %111 = vector.load %arg17[%c0_74, %c0_75] : memref<1x32xf32, #tpu.memory_space<vmem>>, vector<1x32xf32>
      %c0_76 = arith.constant 0 : index
      %c0_77 = arith.constant 0 : index
      %112 = vector.load %arg18[%c0_76, %c0_77] : memref<1x32xf32, #tpu.memory_space<vmem>>, vector<1x32xf32>
      %cst_78 = arith.constant dense<0.000000e+00> : vector<1xf32>
      %113 = vector.multi_reduction <add>, %110, %cst_78 [1] : vector<1x32xf32> to vector<1xf32>
      %114 = vector.shape_cast %113 : vector<1xf32> to vector<1x1xf32>
      %cst_79 = arith.constant 3.200000e+01 : f32
      %115 = vector.broadcast %cst_79 : f32 to vector<1x1xf32>
      %116 = arith.divf %114, %115 : vector<1x1xf32>
      %117 = vector.broadcast %116 : vector<1x1xf32> to vector<1x32xf32>
      %118 = arith.subf %110, %117 : vector<1x32xf32>
      %119 = arith.mulf %118, %118 : vector<1x32xf32>
      %cst_80 = arith.constant dense<0.000000e+00> : vector<1xf32>
      %120 = vector.multi_reduction <add>, %119, %cst_80 [1] : vector<1x32xf32> to vector<1xf32>
      %121 = vector.shape_cast %120 : vector<1xf32> to vector<1x1xf32>
      %cst_81 = arith.constant 3.200000e+01 : f32
      %122 = vector.broadcast %cst_81 : f32 to vector<1x1xf32>
      %123 = arith.divf %121, %122 : vector<1x1xf32>
      %124 = vector.broadcast %116 : vector<1x1xf32> to vector<1x32xf32>
      %125 = arith.subf %110, %124 : vector<1x32xf32>
      %cst_82 = arith.constant 9.99999974E-6 : f32
      %126 = vector.broadcast %cst_82 : f32 to vector<1x1xf32>
      %127 = arith.addf %123, %126 : vector<1x1xf32>
      %128 = math.rsqrt %127 : vector<1x1xf32>
      %129 = vector.broadcast %128 : vector<1x1xf32> to vector<1x32xf32>
      %130 = arith.mulf %125, %129 : vector<1x32xf32>
      %131 = arith.mulf %130, %111 : vector<1x32xf32>
      %132 = arith.addf %131, %112 : vector<1x32xf32>
      %133 = arith.index_cast %33 : i32 to index
      %c0_83 = arith.constant 0 : index
      %134 = vector.load %arg34[%133, %c0_83] : memref<4x32xf32, #tpu.memory_space<vmem>>, vector<1x32xf32>
      %135 = arith.addf %132, %134 : vector<1x32xf32>
      %c0_84 = arith.constant 0 : index
      %c0_85 = arith.constant 0 : index
      %136 = vector.load %arg19[%c0_84, %c0_85] : memref<1x32xf32, #tpu.memory_space<vmem>>, vector<1x32xf32>
      %c0_86 = arith.constant 0 : index
      %c0_87 = arith.constant 0 : index
      %137 = vector.load %arg20[%c0_86, %c0_87] : memref<1x32xf32, #tpu.memory_space<vmem>>, vector<1x32xf32>
      %cst_88 = arith.constant dense<0.000000e+00> : vector<1xf32>
      %138 = vector.multi_reduction <add>, %135, %cst_88 [1] : vector<1x32xf32> to vector<1xf32>
      %139 = vector.shape_cast %138 : vector<1xf32> to vector<1x1xf32>
      %cst_89 = arith.constant 3.200000e+01 : f32
      %140 = vector.broadcast %cst_89 : f32 to vector<1x1xf32>
      %141 = arith.divf %139, %140 : vector<1x1xf32>
      %142 = vector.broadcast %141 : vector<1x1xf32> to vector<1x32xf32>
      %143 = arith.subf %135, %142 : vector<1x32xf32>
      %144 = arith.mulf %143, %143 : vector<1x32xf32>
      %cst_90 = arith.constant dense<0.000000e+00> : vector<1xf32>
      %145 = vector.multi_reduction <add>, %144, %cst_90 [1] : vector<1x32xf32> to vector<1xf32>
      %146 = vector.shape_cast %145 : vector<1xf32> to vector<1x1xf32>
      %cst_91 = arith.constant 3.200000e+01 : f32
      %147 = vector.broadcast %cst_91 : f32 to vector<1x1xf32>
      %148 = arith.divf %146, %147 : vector<1x1xf32>
      %149 = vector.broadcast %141 : vector<1x1xf32> to vector<1x32xf32>
      %150 = arith.subf %135, %149 : vector<1x32xf32>
      %cst_92 = arith.constant 9.99999974E-6 : f32
      %151 = vector.broadcast %cst_92 : f32 to vector<1x1xf32>
      %152 = arith.addf %148, %151 : vector<1x1xf32>
      %153 = math.rsqrt %152 : vector<1x1xf32>
      %154 = vector.broadcast %153 : vector<1x1xf32> to vector<1x32xf32>
      %155 = arith.mulf %150, %154 : vector<1x32xf32>
      %156 = arith.mulf %155, %136 : vector<1x32xf32>
      %157 = arith.addf %156, %137 : vector<1x32xf32>
      %c0_93 = arith.constant 0 : index
      %c0_94 = arith.constant 0 : index
      %158 = vector.load %arg23[%c0_93, %c0_94] : memref<32x64xf32, #tpu.memory_space<vmem>>, vector<32x64xf32>
      %cst_95 = arith.constant dense<0.000000e+00> : vector<1x64xf32>
      %159 = tpu.matmul %157, %158, %cst_95 {dimension_numbers = #tpu.dot_dimension_numbers<[1], [0], [0], [1], [0, 0, 1, 1], [], []>} : vector<1x32xf32>, vector<32x64xf32>, vector<1x64xf32> -> vector<1x64xf32>
      %c0_96 = arith.constant 0 : index
      %c0_97 = arith.constant 0 : index
      %160 = vector.load %arg24[%c0_96, %c0_97] : memref<1x64xf32, #tpu.memory_space<vmem>>, vector<1x64xf32>
      %161 = arith.addf %159, %160 : vector<1x64xf32>
      %cst_98 = arith.constant 0.000000e+00 : f32
      %162 = vector.broadcast %cst_98 : f32 to vector<1x64xf32>
      %163 = arith.maximumf %161, %162 : vector<1x64xf32>
      %c0_99 = arith.constant 0 : index
      %c0_100 = arith.constant 0 : index
      %164 = vector.load %arg25[%c0_99, %c0_100] : memref<64x32xf32, #tpu.memory_space<vmem>>, vector<64x32xf32>
      %cst_101 = arith.constant dense<0.000000e+00> : vector<1x32xf32>
      %165 = tpu.matmul %163, %164, %cst_101 {dimension_numbers = #tpu.dot_dimension_numbers<[1], [0], [0], [1], [0, 0, 1, 1], [], []>} : vector<1x64xf32>, vector<64x32xf32>, vector<1x32xf32> -> vector<1x32xf32>
      %c0_102 = arith.constant 0 : index
      %c0_103 = arith.constant 0 : index
      %166 = vector.load %arg26[%c0_102, %c0_103] : memref<1x32xf32, #tpu.memory_space<vmem>>, vector<1x32xf32>
      %167 = arith.addf %165, %166 : vector<1x32xf32>
      %168 = arith.addf %157, %167 : vector<1x32xf32>
      %c0_104 = arith.constant 0 : index
      %c0_105 = arith.constant 0 : index
      %169 = vector.load %arg21[%c0_104, %c0_105] : memref<1x32xf32, #tpu.memory_space<vmem>>, vector<1x32xf32>
      %c0_106 = arith.constant 0 : index
      %c0_107 = arith.constant 0 : index
      %170 = vector.load %arg22[%c0_106, %c0_107] : memref<1x32xf32, #tpu.memory_space<vmem>>, vector<1x32xf32>
      %cst_108 = arith.constant dense<0.000000e+00> : vector<1xf32>
      %171 = vector.multi_reduction <add>, %168, %cst_108 [1] : vector<1x32xf32> to vector<1xf32>
      %172 = vector.shape_cast %171 : vector<1xf32> to vector<1x1xf32>
      %cst_109 = arith.constant 3.200000e+01 : f32
      %173 = vector.broadcast %cst_109 : f32 to vector<1x1xf32>
      %174 = arith.divf %172, %173 : vector<1x1xf32>
      %175 = vector.broadcast %174 : vector<1x1xf32> to vector<1x32xf32>
      %176 = arith.subf %168, %175 : vector<1x32xf32>
      %177 = arith.mulf %176, %176 : vector<1x32xf32>
      %cst_110 = arith.constant dense<0.000000e+00> : vector<1xf32>
      %178 = vector.multi_reduction <add>, %177, %cst_110 [1] : vector<1x32xf32> to vector<1xf32>
      %179 = vector.shape_cast %178 : vector<1xf32> to vector<1x1xf32>
      %cst_111 = arith.constant 3.200000e+01 : f32
      %180 = vector.broadcast %cst_111 : f32 to vector<1x1xf32>
      %181 = arith.divf %179, %180 : vector<1x1xf32>
      %182 = vector.broadcast %174 : vector<1x1xf32> to vector<1x32xf32>
      %183 = arith.subf %168, %182 : vector<1x32xf32>
      %cst_112 = arith.constant 9.99999974E-6 : f32
      %184 = vector.broadcast %cst_112 : f32 to vector<1x1xf32>
      %185 = arith.addf %181, %184 : vector<1x1xf32>
      %186 = math.rsqrt %185 : vector<1x1xf32>
      %187 = vector.broadcast %186 : vector<1x1xf32> to vector<1x32xf32>
      %188 = arith.mulf %183, %187 : vector<1x32xf32>
      %189 = arith.mulf %188, %169 : vector<1x32xf32>
      %190 = arith.addf %189, %170 : vector<1x32xf32>
      %c0_113 = arith.constant 0 : index
      %c0_114 = arith.constant 0 : index
      %191 = vector.load %arg27[%c0_113, %c0_114] : memref<32x12xf32, #tpu.memory_space<vmem>>, vector<32x12xf32>
      %cst_115 = arith.constant dense<0.000000e+00> : vector<1x12xf32>
      %192 = tpu.matmul %190, %191, %cst_115 {dimension_numbers = #tpu.dot_dimension_numbers<[1], [0], [0], [1], [0, 0, 1, 1], [], []>} : vector<1x32xf32>, vector<32x12xf32>, vector<1x12xf32> -> vector<1x12xf32>
      %c0_116 = arith.constant 0 : index
      %c0_117 = arith.constant 0 : index
      %193 = vector.load %arg28[%c0_116, %c0_117] : memref<1x12xf32, #tpu.memory_space<vmem>>, vector<1x12xf32>
      %194 = arith.addf %192, %193 : vector<1x12xf32>
      %195 = arith.addf %194, %30 : vector<1x12xf32>
      %196 = arith.index_cast %33 : i32 to index
      %c0_118 = arith.constant 0 : index
      %197 = vector.load %arg31[%196, %c0_118] : memref<4x12xf32, #tpu.memory_space<vmem>>, vector<1x12xf32>
      tpu.vector_store %arg31[%196, %c0_118], %195 {strides = array<i32>} : memref<4x12xf32, #tpu.memory_space<vmem>>, vector<1x12xf32>,
      %c0_119 = arith.constant 0 : index
      %c0_120 = arith.constant 0 : index
      %198 = vector.load %arg29[%c0_119, %c0_120] : memref<32x32xf32, #tpu.memory_space<vmem>>, vector<32x32xf32>
      %cst_121 = arith.constant dense<0.000000e+00> : vector<1x32xf32>
      %199 = tpu.matmul %190, %198, %cst_121 {dimension_numbers = #tpu.dot_dimension_numbers<[1], [0], [0], [1], [0, 0, 1, 1], [], []>} : vector<1x32xf32>, vector<32x32xf32>, vector<1x32xf32> -> vector<1x32xf32>
      %c0_122 = arith.constant 0 : index
      %c0_123 = arith.constant 0 : index
      %200 = vector.load %arg33[%c0_122, %c0_123] : memref<1x32xf32, #tpu.memory_space<vmem>>, vector<1x32xf32>
      %201 = arith.addf %199, %200 : vector<1x32xf32>
      %c0_124 = arith.constant 0 : index
      %c0_125 = arith.constant 0 : index
      %202 = vector.load %arg32[%c0_124, %c0_125] : memref<1x32xf32, #tpu.memory_space<vmem>>, vector<1x32xf32>
      tpu.vector_store %arg32[%c0_124, %c0_125], %201 {strides = array<i32>} : memref<1x32xf32, #tpu.memory_space<vmem>>, vector<1x32xf32>,
    }
    %c4_i32_38 = arith.constant 4 : i32
    return
  }
  func.func @transform_0(%arg0: i32) -> (i32, i32) {
    %c0_i32 = arith.constant 0 : i32
    %c0_i32_0 = arith.constant 0 : i32
    %c0_i32_1 = arith.constant 0 : i32
    return %c0_i32, %c0_i32_0 : i32, i32
  }
  func.func @transform_1(%arg0: i32) -> (i32, i32) {
    %c0_i32 = arith.constant 0 : i32
    %c0_i32_0 = arith.constant 0 : i32
    %c0_i32_1 = arith.constant 0 : i32
    return %c0_i32, %c0_i32_0 : i32, i32
  }
  func.func @transform_2(%arg0: i32) -> (i32, i32) {
    %c0_i32 = arith.constant 0 : i32
    %c0_i32_0 = arith.constant 0 : i32
    %c0_i32_1 = arith.constant 0 : i32
    return %c0_i32, %c0_i32_0 : i32, i32
  }
  func.func @transform_3(%arg0: i32) -> (i32, i32) {
    %c0_i32 = arith.constant 0 : i32
    %c0_i32_0 = arith.constant 0 : i32
    %c0_i32_1 = arith.constant 0 : i32
    return %c0_i32, %c0_i32_0 : i32, i32
  }
  func.func @transform_4(%arg0: i32) -> (i32, i32) {
    %c0_i32 = arith.constant 0 : i32
    %c0_i32_0 = arith.constant 0 : i32
    %c0_i32_1 = arith.constant 0 : i32
    return %c0_i32, %c0_i32_0 : i32, i32
  }
  func.func @transform_5(%arg0: i32) -> (i32, i32) {
    %c0_i32 = arith.constant 0 : i32
    %c0_i32_0 = arith.constant 0 : i32
    %c0_i32_1 = arith.constant 0 : i32
    return %c0_i32, %c0_i32_0 : i32, i32
  }
  func.func @transform_6(%arg0: i32) -> (i32, i32) {
    %c0_i32 = arith.constant 0 : i32
    %c0_i32_0 = arith.constant 0 : i32
    %c0_i32_1 = arith.constant 0 : i32
    return %c0_i32, %c0_i32_0 : i32, i32
  }
  func.func @transform_7(%arg0: i32) -> (i32, i32) {
    %c0_i32 = arith.constant 0 : i32
    %c0_i32_0 = arith.constant 0 : i32
    %c0_i32_1 = arith.constant 0 : i32
    return %c0_i32, %c0_i32_0 : i32, i32
  }
  func.func @transform_8(%arg0: i32) -> (i32, i32) {
    %c0_i32 = arith.constant 0 : i32
    %c0_i32_0 = arith.constant 0 : i32
    %c0_i32_1 = arith.constant 0 : i32
    return %c0_i32, %c0_i32_0 : i32, i32
  }
  func.func @transform_9(%arg0: i32) -> (i32, i32) {
    %c0_i32 = arith.constant 0 : i32
    %c0_i32_0 = arith.constant 0 : i32
    %c0_i32_1 = arith.constant 0 : i32
    return %c0_i32, %c0_i32_0 : i32, i32
  }
  func.func @transform_10(%arg0: i32) -> (i32, i32) {
    %c0_i32 = arith.constant 0 : i32
    %c0_i32_0 = arith.constant 0 : i32
    %c0_i32_1 = arith.constant 0 : i32
    return %c0_i32, %c0_i32_0 : i32, i32
  }
  func.func @transform_11(%arg0: i32) -> (i32, i32) {
    %c0_i32 = arith.constant 0 : i32
    %c0_i32_0 = arith.constant 0 : i32
    %c0_i32_1 = arith.constant 0 : i32
    return %c0_i32, %c0_i32_0 : i32, i32
  }
  func.func @transform_12(%arg0: i32) -> (i32, i32) {
    %c0_i32 = arith.constant 0 : i32
    %c0_i32_0 = arith.constant 0 : i32
    %c0_i32_1 = arith.constant 0 : i32
    return %c0_i32, %c0_i32_0 : i32, i32
  }
  func.func @transform_13(%arg0: i32) -> (i32, i32) {
    %c0_i32 = arith.constant 0 : i32
    %c0_i32_0 = arith.constant 0 : i32
    %c0_i32_1 = arith.constant 0 : i32
    return %c0_i32, %c0_i32_0 : i32, i32
  }
  func.func @transform_14(%arg0: i32) -> (i32, i32) {
    %c0_i32 = arith.constant 0 : i32
    %c0_i32_0 = arith.constant 0 : i32
    %c0_i32_1 = arith.constant 0 : i32
    return %c0_i32, %c0_i32_0 : i32, i32
  }
  func.func @transform_15(%arg0: i32) -> (i32, i32) {
    %c0_i32 = arith.constant 0 : i32
    %c0_i32_0 = arith.constant 0 : i32
    %c0_i32_1 = arith.constant 0 : i32
    return %c0_i32, %c0_i32_0 : i32, i32
  }
  func.func @transform_16(%arg0: i32) -> (i32, i32) {
    %c0_i32 = arith.constant 0 : i32
    %c0_i32_0 = arith.constant 0 : i32
    %c0_i32_1 = arith.constant 0 : i32
    return %c0_i32, %c0_i32_0 : i32, i32
  }
  func.func @transform_17(%arg0: i32) -> (i32, i32) {
    %c0_i32 = arith.constant 0 : i32
    %c0_i32_0 = arith.constant 0 : i32
    %c0_i32_1 = arith.constant 0 : i32
    return %c0_i32, %c0_i32_0 : i32, i32
  }
  func.func @transform_18(%arg0: i32) -> (i32, i32) {
    %c0_i32 = arith.constant 0 : i32
    %c0_i32_0 = arith.constant 0 : i32
    %c0_i32_1 = arith.constant 0 : i32
    return %c0_i32, %c0_i32_0 : i32, i32
  }
  func.func @transform_19(%arg0: i32) -> (i32, i32) {
    %c0_i32 = arith.constant 0 : i32
    %c0_i32_0 = arith.constant 0 : i32
    %c0_i32_1 = arith.constant 0 : i32
    return %c0_i32, %c0_i32_0 : i32, i32
  }
  func.func @transform_20(%arg0: i32) -> (i32, i32) {
    %c0_i32 = arith.constant 0 : i32
    %c0_i32_0 = arith.constant 0 : i32
    %c0_i32_1 = arith.constant 0 : i32
    return %c0_i32, %c0_i32_0 : i32, i32
  }
  func.func @transform_21(%arg0: i32) -> (i32, i32) {
    %c0_i32 = arith.constant 0 : i32
    %c0_i32_0 = arith.constant 0 : i32
    %c0_i32_1 = arith.constant 0 : i32
    return %c0_i32, %c0_i32_0 : i32, i32
  }
  func.func @transform_22(%arg0: i32) -> (i32, i32) {
    %c0_i32 = arith.constant 0 : i32
    %c0_i32_0 = arith.constant 0 : i32
    %c0_i32_1 = arith.constant 0 : i32
    return %c0_i32, %c0_i32_0 : i32, i32
  }
  func.func @transform_23(%arg0: i32) -> (i32, i32) {
    %c0_i32 = arith.constant 0 : i32
    %c0_i32_0 = arith.constant 0 : i32
    %c0_i32_1 = arith.constant 0 : i32
    return %c0_i32, %c0_i32_0 : i32, i32
  }
  func.func @transform_24(%arg0: i32) -> (i32, i32) {
    %c0_i32 = arith.constant 0 : i32
    %c0_i32_0 = arith.constant 0 : i32
    %c0_i32_1 = arith.constant 0 : i32
    return %c0_i32, %c0_i32_0 : i32, i32
  }
  func.func @transform_25(%arg0: i32) -> (i32, i32) {
    %c0_i32 = arith.constant 0 : i32
    %c0_i32_0 = arith.constant 0 : i32
    %c0_i32_1 = arith.constant 0 : i32
    return %c0_i32, %c0_i32_0 : i32, i32
  }
  func.func @transform_26(%arg0: i32) -> (i32, i32) {
    %c0_i32 = arith.constant 0 : i32
    %c0_i32_0 = arith.constant 0 : i32
    %c0_i32_1 = arith.constant 0 : i32
    return %c0_i32, %c0_i32_0 : i32, i32
  }
  func.func @transform_27(%arg0: i32) -> (i32, i32) {
    %c0_i32 = arith.constant 0 : i32
    %c0_i32_0 = arith.constant 0 : i32
    %c0_i32_1 = arith.constant 0 : i32
    return %c0_i32, %c0_i32_0 : i32, i32
  }
  func.func @transform_28(%arg0: i32) -> (i32, i32) {
    %c0_i32 = arith.constant 0 : i32
    %c0_i32_0 = arith.constant 0 : i32
    %c0_i32_1 = arith.constant 0 : i32
    return %c0_i32, %c0_i32_0 : i32, i32
  }
  func.func @transform_29(%arg0: i32) -> (i32, i32) {
    %c0_i32 = arith.constant 0 : i32
    %c0_i32_0 = arith.constant 0 : i32
    %c0_i32_1 = arith.constant 0 : i32
    return %c0_i32, %c0_i32_0 : i32, i32
  }
  func.func @transform_30(%arg0: i32) -> (i32, i32) {
    %c0_i32 = arith.constant 0 : i32
    %c0_i32_0 = arith.constant 0 : i32
    %c0_i32_1 = arith.constant 0 : i32
    return %c0_i32, %c0_i32_0 : i32, i32
  }
}

</mosaic_0001>

<llo_original>
// kernel: faceformer_forward.1
$region0: #{faceformer_forward.1}
  #allocation0 [shape = 'u32[]', space=smem, size = 0x4, offset = 0x4, fixed_abs, tag = 'smem constant byte address 0x4 - core index']
  #allocation1 [shape = 'u32[144,128]{1,0:T(1,128)}', space=vmem, size = 0x12000, scoped, tag = 'internal scratch']
  #allocation2 [shape = 'f32[1,32]{1,0:T(1,128)}', space=vmem, size = 0x200, scoped, tag = 'scratch operand']
  #allocation3 [shape = 'f32[1,32]{1,0:T(1,128)}', space=vmem, size = 0x200, scoped, tag = 'scratch operand']
  #allocation4 [shape = 'f32[4,32]{1,0:T(4,128)}', space=vmem, size = 0x800, scoped, tag = 'scratch operand']
  #allocation5 [shape = 'f32[4,32]{1,0:T(4,128)}', space=vmem, size = 0x800, scoped, tag = 'scratch operand']
  #allocation6 [shape = 'f32[4,32]{1,0:T(4,128)}', space=vmem, size = 0x800, scoped, tag = 'scratch operand']
  %s0 = inlined_call_operand.smem [shape: u32[31], index: -1, kind: input, shape index: {}]
  %s1 = sld [smem:[%s0]]
  %s2 = scalar_lea.smem %s0, 1
  %s3 = sld [smem:[%s2]]
  %s4 = scalar_lea.smem %s0, 2
  %s5 = sld [smem:[%s4]]
  %s6 = scalar_lea.smem %s0, 3
  %s7 = sld [smem:[%s6]]
  %s8 = scalar_lea.smem %s0, 4
  %s9 = sld [smem:[%s8]]
  %s10 = scalar_lea.smem %s0, 5
  %s11 = sld [smem:[%s10]]
  %s12 = scalar_lea.smem %s0, 6
  %s13 = sld [smem:[%s12]]
  %s14 = scalar_lea.smem %s0, 7
  %s15 = sld [smem:[%s14]]
  %s16 = scalar_lea.smem %s0, 8
  %s17 = sld [smem:[%s16]]
  %s18 = scalar_lea.smem %s0, 9
  %s19 = sld [smem:[%s18]]
  %s20 = scalar_lea.smem %s0, 10
  %s21 = sld [smem:[%s20]]
  %s22 = scalar_lea.smem %s0, 11
  %s23 = sld [smem:[%s22]]
  %s24 = scalar_lea.smem %s0, 12
  %s25 = sld [smem:[%s24]]
  %s26 = scalar_lea.smem %s0, 13
  %s27 = sld [smem:[%s26]]
  %s28 = scalar_lea.smem %s0, 14
  %s29 = sld [smem:[%s28]]
  %s30 = scalar_lea.smem %s0, 15
  %s31 = sld [smem:[%s30]]
  %s32 = scalar_lea.smem %s0, 16
  %s33 = sld [smem:[%s32]]
  %s34 = scalar_lea.smem %s0, 17
  %s35 = sld [smem:[%s34]]
  %s36 = scalar_lea.smem %s0, 18
  %s37 = sld [smem:[%s36]]
  %s38 = scalar_lea.smem %s0, 19
  %s39 = sld [smem:[%s38]]
  %s40 = scalar_lea.smem %s0, 20
  %s41 = sld [smem:[%s40]]
  %s42 = scalar_lea.smem %s0, 21
  %s43 = sld [smem:[%s42]]
  %s44 = scalar_lea.smem %s0, 22
  %s45 = sld [smem:[%s44]]
  %s46 = scalar_lea.smem %s0, 23
  %s47 = sld [smem:[%s46]]
  %s48 = scalar_lea.smem %s0, 24
  %s49 = sld [smem:[%s48]]
  %s50 = scalar_lea.smem %s0, 25
  %s51 = sld [smem:[%s50]]
  %s52 = scalar_lea.smem %s0, 26
  %s53 = sld [smem:[%s52]]
  %s54 = scalar_lea.smem %s0, 27
  %s55 = sld [smem:[%s54]]
  %s56 = scalar_lea.smem %s0, 28
  %s57 = sld [smem:[%s56]]
  %s58 = scalar_lea.smem %s0, 29
  %s59 = sld [smem:[%s58]]
  %s60 = scalar_lea.smem %s0, 30
  %s61 = sld [smem:[%s60]]
  %s62 = sld [smem:[#allocation0]]
  $region137: #{faceformer_forward.1} parent=0
    _
  %s64 = ssub.s32 1, %s62
  %s65 = scalar_select 0, %s64, %s62
  $region1: #{faceformer_forward.1} parent=0
    #allocation7 [shape = 'u8[2048]{0}', space=vmem, size = 0x800, scoped, tag = 'output window, operand 0, single buffered']
    #allocation8 [shape = 's32[1]{0}', space=sflag, size = 0x4, scoped, tag = 'scoped memory for faceformer_forward.1']
    %66 = vsyncpa [#allocation8], 0
    // Predicated region
    $region2: #{faceformer_forward.1} parent=1 // pred_check
      _
    $region3: #{faceformer_forward.1} parent=1 // pred_check_branch
      %68 = sbr.rel (0) target = $region5
    $region4: #{faceformer_forward.1} parent=1 // pred_region
      _
    $region5: #{faceformer_forward.1} parent=1 // pred_fallthru
      _
    // Predicated region
    $region6: #{faceformer_forward.1} parent=1 // pred_check
      _
    $region7: #{faceformer_forward.1} parent=1 // pred_check_branch
      %70 = sbr.rel (0) target = $region9
    $region8: #{faceformer_forward.1} parent=1 // pred_region
      _
    $region9: #{faceformer_forward.1} parent=1 // pred_fallthru
      _
    // Predicated region
    $region10: #{faceformer_forward.1} parent=1 // pred_check
      _
    $region11: #{faceformer_forward.1} parent=1 // pred_check_branch
      %72 = sbr.rel (0) target = $region13
    $region12: #{faceformer_forward.1} parent=1 // pred_region
      _
    $region13: #{faceformer_forward.1} parent=1 // pred_fallthru
      _
    // Predicated region
    $region14: #{faceformer_forward.1} parent=1 // pred_check
      _
    $region15: #{faceformer_forward.1} parent=1 // pred_check_branch
      %74 = sbr.rel (0) target = $region17
    $region16: #{faceformer_forward.1} parent=1 // pred_region
      _
    $region17: #{faceformer_forward.1} parent=1 // pred_fallthru
      _
    // Predicated region
    $region18: #{faceformer_forward.1} parent=1 // pred_check
      _
    $region19: #{faceformer_forward.1} parent=1 // pred_check_branch
      %76 = sbr.rel (0) target = $region21
    $region20: #{faceformer_forward.1} parent=1 // pred_region
      _
    $region21: #{faceformer_forward.1} parent=1 // pred_fallthru
      _
    // Predicated region
    $region22: #{faceformer_forward.1} parent=1 // pred_check
      _
    $region23: #{faceformer_forward.1} parent=1 // pred_check_branch
      %78 = sbr.rel (0) target = $region25
    $region24: #{faceformer_forward.1} parent=1 // pred_region
      _
    $region25: #{faceformer_forward.1} parent=1 // pred_fallthru
      _
    // Predicated region
    $region26: #{faceformer_forward.1} parent=1 // pred_check
      _
    $region27: #{faceformer_forward.1} parent=1 // pred_check_branch
      %80 = sbr.rel (0) target = $region29
    $region28: #{faceformer_forward.1} parent=1 // pred_region
      _
    $region29: #{faceformer_forward.1} parent=1 // pred_fallthru
      _
    // Predicated region
    $region30: #{faceformer_forward.1} parent=1 // pred_check
      _
    $region31: #{faceformer_forward.1} parent=1 // pred_check_branch
      %82 = sbr.rel (0) target = $region33
    $region32: #{faceformer_forward.1} parent=1 // pred_region
      _
    $region33: #{faceformer_forward.1} parent=1 // pred_fallthru
      _
    // Predicated region
    $region34: #{faceformer_forward.1} parent=1 // pred_check
      _
    $region35: #{faceformer_forward.1} parent=1 // pred_check_branch
      %84 = sbr.rel (0) target = $region37
    $region36: #{faceformer_forward.1} parent=1 // pred_region
      _
    $region37: #{faceformer_forward.1} parent=1 // pred_fallthru
      _
    // Predicated region
    $region38: #{faceformer_forward.1} parent=1 // pred_check
      _
    $region39: #{faceformer_forward.1} parent=1 // pred_check_branch
      %86 = sbr.rel (0) target = $region41
    $region40: #{faceformer_forward.1} parent=1 // pred_region
      _
    $region41: #{faceformer_forward.1} parent=1 // pred_fallthru
      _
    // Predicated region
    $region42: #{faceformer_forward.1} parent=1 // pred_check
      _
    $region43: #{faceformer_forward.1} parent=1 // pred_check_branch
      %88 = sbr.rel (0) target = $region45
    $region44: #{faceformer_forward.1} parent=1 // pred_region
      _
    $region45: #{faceformer_forward.1} parent=1 // pred_fallthru
      _
    // Predicated region
    $region46: #{faceformer_forward.1} parent=1 // pred_check
      _
    $region47: #{faceformer_forward.1} parent=1 // pred_check_branch
      %90 = sbr.rel (0) target = $region49
    $region48: #{faceformer_forward.1} parent=1 // pred_region
      _
    $region49: #{faceformer_forward.1} parent=1 // pred_fallthru
      _
    // Predicated region
    $region50: #{faceformer_forward.1} parent=1 // pred_check
      _
    $region51: #{faceformer_forward.1} parent=1 // pred_check_branch
      %92 = sbr.rel (0) target = $region53
    $region52: #{faceformer_forward.1} parent=1 // pred_region
      _
    $region53: #{faceformer_forward.1} parent=1 // pred_fallthru
      _
    // Predicated region
    $region54: #{faceformer_forward.1} parent=1 // pred_check
      _
    $region55: #{faceformer_forward.1} parent=1 // pred_check_branch
      %94 = sbr.rel (0) target = $region57
    $region56: #{faceformer_forward.1} parent=1 // pred_region
      _
    $region57: #{faceformer_forward.1} parent=1 // pred_fallthru
      _
    // Predicated region
    $region58: #{faceformer_forward.1} parent=1 // pred_check
      _
    $region59: #{faceformer_forward.1} parent=1 // pred_check_branch
      %96 = sbr.rel (0) target = $region61
    $region60: #{faceformer_forward.1} parent=1 // pred_region
      _
    $region61: #{faceformer_forward.1} parent=1 // pred_fallthru
      _
    // Predicated region
    $region62: #{faceformer_forward.1} parent=1 // pred_check
      _
    $region63: #{faceformer_forward.1} parent=1 // pred_check_branch
      %98 = sbr.rel (0) target = $region65
    $region64: #{faceformer_forward.1} parent=1 // pred_region
      _
    $region65: #{faceformer_forward.1} parent=1 // pred_fallthru
      _
    // Predicated region
    $region66: #{faceformer_forward.1} parent=1 // pred_check
      _
    $region67: #{faceformer_forward.1} parent=1 // pred_check_branch
      %100 = sbr.rel (0) target = $region69
    $region68: #{faceformer_forward.1} parent=1 // pred_region
      _
    $region69: #{faceformer_forward.1} parent=1 // pred_fallthru
      _
    // Predicated region
    $region70: #{faceformer_forward.1} parent=1 // pred_check
      _
    $region71: #{faceformer_forward.1} parent=1 // pred_check_branch
      %102 = sbr.rel (0) target = $region73
    $region72: #{faceformer_forward.1} parent=1 // pred_region
      _
    $region73: #{faceformer_forward.1} parent=1 // pred_fallthru
      _
    // Predicated region
    $region74: #{faceformer_forward.1} parent=1 // pred_check
      _
    $region75: #{faceformer_forward.1} parent=1 // pred_check_branch
      %104 = sbr.rel (0) target = $region77
    $region76: #{faceformer_forward.1} parent=1 // pred_region
      _
    $region77: #{faceformer_forward.1} parent=1 // pred_fallthru
      _
    // Predicated region
    $region78: #{faceformer_forward.1} parent=1 // pred_check
      _
    $region79: #{faceformer_forward.1} parent=1 // pred_check_branch
      %106 = sbr.rel (0) target = $region81
    $region80: #{faceformer_forward.1} parent=1 // pred_region
      _
    $region81: #{faceformer_forward.1} parent=1 // pred_fallthru
      _
    // Predicated region
    $region82: #{faceformer_forward.1} parent=1 // pred_check
      _
    $region83: #{faceformer_forward.1} parent=1 // pred_check_branch
      %108 = sbr.rel (0) target = $region85
    $region84: #{faceformer_forward.1} parent=1 // pred_region
      _
    $region85: #{faceformer_forward.1} parent=1 // pred_fallthru
      _
    // Predicated region
    $region86: #{faceformer_forward.1} parent=1 // pred_check
      _
    $region87: #{faceformer_forward.1} parent=1 // pred_check_branch
      %110 = sbr.rel (0) target = $region89
    $region88: #{faceformer_forward.1} parent=1 // pred_region
      _
    $region89: #{faceformer_forward.1} parent=1 // pred_fallthru
      _
    // Predicated region
    $region90: #{faceformer_forward.1} parent=1 // pred_check
      _
    $region91: #{faceformer_forward.1} parent=1 // pred_check_branch
      %112 = sbr.rel (0) target = $region93
    $region92: #{faceformer_forward.1} parent=1 // pred_region
      _
    $region93: #{faceformer_forward.1} parent=1 // pred_fallthru
      _
    // Predicated region
    $region94: #{faceformer_forward.1} parent=1 // pred_check
      _
    $region95: #{faceformer_forward.1} parent=1 // pred_check_branch
      %114 = sbr.rel (0) target = $region97
    $region96: #{faceformer_forward.1} parent=1 // pred_region
      _
    $region97: #{faceformer_forward.1} parent=1 // pred_fallthru
      _
    // Predicated region
    $region98: #{faceformer_forward.1} parent=1 // pred_check
      _
    $region99: #{faceformer_forward.1} parent=1 // pred_check_branch
      %116 = sbr.rel (0) target = $region101
    $region100: #{faceformer_forward.1} parent=1 // pred_region
      _
    $region101: #{faceformer_forward.1} parent=1 // pred_fallthru
      _
    // Predicated region
    $region102: #{faceformer_forward.1} parent=1 // pred_check
      _
    $region103: #{faceformer_forward.1} parent=1 // pred_check_branch
      %118 = sbr.rel (0) target = $region105
    $region104: #{faceformer_forward.1} parent=1 // pred_region
      _
    $region105: #{faceformer_forward.1} parent=1 // pred_fallthru
      _
    // Predicated region
    $region106: #{faceformer_forward.1} parent=1 // pred_check
      _
    $region107: #{faceformer_forward.1} parent=1 // pred_check_branch
      %120 = sbr.rel (0) target = $region109
    $region108: #{faceformer_forward.1} parent=1 // pred_region
      _
    $region109: #{faceformer_forward.1} parent=1 // pred_fallthru
      _
    // Predicated region
    $region110: #{faceformer_forward.1} parent=1 // pred_check
      _
    $region111: #{faceformer_forward.1} parent=1 // pred_check_branch
      %122 = sbr.rel (0) target = $region113
    $region112: #{faceformer_forward.1} parent=1 // pred_region
      _
    $region113: #{faceformer_forward.1} parent=1 // pred_fallthru
      _
    // Predicated region
    $region114: #{faceformer_forward.1} parent=1 // pred_check
      _
    $region115: #{faceformer_forward.1} parent=1 // pred_check_branch
      %124 = sbr.rel (0) target = $region117
    $region116: #{faceformer_forward.1} parent=1 // pred_region
      _
    $region117: #{faceformer_forward.1} parent=1 // pred_fallthru
      _
    // Predicated region
    $region118: #{faceformer_forward.1} parent=1 // pred_check
      _
    $region119: #{faceformer_forward.1} parent=1 // pred_check_branch
      %126 = sbr.rel (0) target = $region121
    $region120: #{faceformer_forward.1} parent=1 // pred_region
      _
    $region121: #{faceformer_forward.1} parent=1 // pred_fallthru
      _
    %v127 = vld [vmem:[%s3] sm:$0x1]
    %v128 = vld [vmem:[%s15] sm:$0x3]
    %vm129 = vcmask 15360
    %v131 = vsel %vm129, %v127, 0
    %vm133 = vcmask 1041408
    %v135 = vsel %vm133, %v128, 0
    %137 = vmatprep.subr.mxu0 0.0
    %138 = vmatpush1.msra.mxu0 %v135
    %139 = vmatprep.subr.mxu0 0.0
    %140 = vmatpush1.msra.mxu0 0.0
    %141 = vmatprep.subr.mxu0 0.0
    %142 = vmatpush1.msra.mxu0 0.0
    %143 = vmatprep.subr.mxu0 0.0
    %144 = vmatpush1.msra.mxu0 0.0
    %145 = vmatprep.subr.mxu0 0.0
    %146 = vmatpush1.msra.mxu0 0.0
    %147 = vmatprep.subr.mxu0 0.0
    %148 = vmatpush1.msra.mxu0 0.0
    %149 = vmatprep.subr.mxu0 0.0
    %150 = vmatpush1.msra.mxu0 0.0
    %151 = vmatprep.subr.mxu0 0.0
    %152 = vmatpush1.msra.mxu0 0.0
    %153 = vmatprep.subr.mxu0 0.0
    %154 = vmatpush1.msra.mxu0 0.0
    %155 = vmatprep.subr.mxu0 0.0
    %156 = vmatpush1.msra.mxu0 0.0
    %157 = vmatprep.subr.mxu0 0.0
    %158 = vmatpush1.msra.mxu0 0.0
    %159 = vmatprep.subr.mxu0 0.0
    %160 = vmatpush1.msra.mxu0 0.0
    %161 = vmatprep.subr.mxu0 0.0
    %162 = vmatpush1.msra.mxu0 0.0
    %163 = vmatprep.subr.mxu0 0.0
    %164 = vmatpush1.msra.mxu0 0.0
    %165 = vmatprep.subr.mxu0 0.0
    %166 = vmatpush1.msra.mxu0 0.0
    %167 = vmatprep.subr.mxu0 0.0
    %168 = vmatpush1.msra.mxu0 0.0
    %169 = vmatprep.subr.mxu0 0.0
    %170 = vmatpush1.msra.mxu0 0.0
    %171 = vmatprep.subr.mxu0 0.0
    %172 = vmatpush1.msra.mxu0 0.0
    %173 = vmatprep.subr.mxu0 0.0
    %174 = vmatpush1.msra.mxu0 0.0
    %175 = vmatprep.subr.mxu0 0.0
    %176 = vmatpush1.msra.mxu0 0.0
    %177 = vmatprep.subr.mxu0 0.0
    %178 = vmatpush1.msra.mxu0 0.0
    %179 = vmatprep.subr.mxu0 0.0
    %180 = vmatpush1.msra.mxu0 0.0
    %181 = vmatprep.subr.mxu0 0.0
    %182 = vmatpush1.msra.mxu0 0.0
    %183 = vmatprep.subr.mxu0 0.0
    %184 = vmatpush1.msra.mxu0 0.0
    %185 = vmatprep.subr.mxu0 0.0
    %186 = vmatpush1.msra.mxu0 0.0
    %187 = vmatprep.subr.mxu0 0.0
    %188 = vmatpush1.msra.mxu0 0.0
    %189 = vmatprep.subr.mxu0 0.0
    %190 = vmatpush1.msra.mxu0 0.0
    %191 = vmatprep.subr.mxu0 0.0
    %192 = vmatpush1.msra.mxu0 0.0
    %193 = vmatprep.subr.mxu0 0.0
    %194 = vmatpush1.msra.mxu0 0.0
    %195 = vmatprep.subr.mxu0 0.0
    %196 = vmatpush1.msra.mxu0 0.0
    %197 = vmatprep.subr.mxu0 0.0
    %198 = vmatpush1.msra.mxu0 0.0
    %199 = vmatprep.subr.mxu0 0.0
    %200 = vmatpush1.msra.mxu0 0.0
    %201 = vmatprep.mubr.f32.mxu0 0.0
    %202 = vmatmul.mubr.f32.gmra.mrb[0].mxu0 %v131
    %v203 = vpop.f32.mrb[0].mxu0
    %v204 = vadd.f32 0.0, %v203
    %v205 = vpop.f32.mrb[0].mxu0
    %206 = vdwg.mxu0
    %vm207 = vcmask 253952
    %208 = vst.msk [vmem:[#allocation2] sm:$0x1] %vm207, %v204
    %v209 = vld [vmem:[%s59] sm:$0x1]
    %v210 = vadd.f32 %v209, %v204
    %211 = vst.msk [vmem:[#allocation3] sm:$0x1] %vm207, %v210
    %v212 = vld [vmem:[%s1] sm:$0xff]
    %v213 = vld [vmem:[%s1 + $0x8] sm:$0xff]
    %v214 = vld [vmem:[%s1 + $0x10] sm:$0xff]
    %v215 = vld [vmem:[%s11] sm:$0xff]
    %v216 = vld [vmem:[%s11 + $0x8] sm:$0xff]
    %v217 = vld [vmem:[%s11 + $0x10] sm:$0xff]
    %v218 = vld [vmem:[%s11 + $0x18] sm:$0xff]
    %v219 = vld [vmem:[%s11 + $0x20] sm:$0xff]
    %v220 = vld [vmem:[%s11 + $0x28] sm:$0xff]
    %v221 = vld [vmem:[%s11 + $0x30] sm:$0xff]
    %v222 = vld [vmem:[%s11 + $0x38] sm:$0xff]
    %v223 = vld [vmem:[%s11 + $0x40] sm:$0xff]
    %v224 = vld [vmem:[%s11 + $0x48] sm:$0xff]
    %v225 = vld [vmem:[%s11 + $0x50] sm:$0xff]
    %v226 = vld [vmem:[%s11 + $0x58] sm:$0xff]
    %v227 = vld [vmem:[%s11 + $0x60] sm:$0xff]
    %v228 = vld [vmem:[%s11 + $0x68] sm:$0xff]
    %v229 = vld [vmem:[%s11 + $0x70] sm:$0xff]
    %v230 = vld [vmem:[%s11 + $0x78] sm:$0xff]
    %v231 = vld [vmem:[%s11 + $0x80] sm:$0xff]
    %v232 = vld [vmem:[%s11 + $0x88] sm:$0xff]
    %v233 = vld [vmem:[%s11 + $0x90] sm:$0xff]
    %v234 = vld [vmem:[%s11 + $0x98] sm:$0xff]
    %v235 = vld [vmem:[%s11 + $0xa0] sm:$0xff]
    %v236 = vld [vmem:[%s11 + $0xa8] sm:$0xff]
    %v237 = vld [vmem:[%s11 + $0xb0] sm:$0xff]
    %v238 = vld [vmem:[%s11 + $0xb8] sm:$0xff]
    %v239 = vld [vmem:[%s11 + $0xc0] sm:$0xff]
    %v240 = vld [vmem:[%s11 + $0xc8] sm:$0xff]
    %v241 = vld [vmem:[%s11 + $0xd0] sm:$0xff]
    %v242 = vld [vmem:[%s11 + $0xd8] sm:$0xff]
    %v243 = vld [vmem:[%s11 + $0xe0] sm:$0xff]
    %v244 = vld [vmem:[%s11 + $0xe8] sm:$0xff]
    %v245 = vld [vmem:[%s11 + $0xf0] sm:$0xff]
    %v246 = vld [vmem:[%s11 + $0xf8] sm:$0xff]
    %v247 = vld [vmem:[%s11 + $0x100] sm:$0xff]
    %v248 = vld [vmem:[%s11 + $0x108] sm:$0xff]
    %v249 = vld [vmem:[%s11 + $0x110] sm:$0xff]
    %v250 = vld [vmem:[%s11 + $0x118] sm:$0xff]
    %v251 = vld [vmem:[%s11 + $0x120] sm:$0xff]
    %v252 = vld [vmem:[%s11 + $0x128] sm:$0xff]
    %v253 = vld [vmem:[%s11 + $0x130] sm:$0xff]
    %v254 = vld [vmem:[%s11 + $0x138] sm:$0xff]
    %v255 = vld [vmem:[%s11 + $0x140] sm:$0xff]
    %v256 = vld [vmem:[%s11 + $0x148] sm:$0xff]
    %v257 = vld [vmem:[%s11 + $0x150] sm:$0xff]
    %v258 = vld [vmem:[%s11 + $0x158] sm:$0xff]
    %v259 = vld [vmem:[%s11 + $0x160] sm:$0xff]
    %v260 = vld [vmem:[%s11 + $0x168] sm:$0xff]
    %v261 = vld [vmem:[%s11 + $0x170] sm:$0xff]
    %v262 = vld [vmem:[%s11 + $0x178] sm:$0xff]
    %v263 = vld [vmem:[%s11 + $0x180] sm:$0xff]
    %v264 = vld [vmem:[%s11 + $0x188] sm:$0xff]
    %v265 = vld [vmem:[%s11 + $0x190] sm:$0xff]
    %v266 = vld [vmem:[%s11 + $0x198] sm:$0xff]
    %v267 = vld [vmem:[%s11 + $0x1a0] sm:$0xff]
    %v268 = vld [vmem:[%s11 + $0x1a8] sm:$0xff]
    %v269 = vld [vmem:[%s11 + $0x1b0] sm:$0xff]
    %v270 = vld [vmem:[%s11 + $0x1b8] sm:$0xff]
    %v271 = vld [vmem:[%s11 + $0x1c0] sm:$0xff]
    %v272 = vld [vmem:[%s11 + $0x1c8] sm:$0xff]
    %v273 = vld [vmem:[%s11 + $0x1d0] sm:$0xff]
    %v274 = vld [vmem:[%s11 + $0x1d8] sm:$0xff]
    %v275 = vld [vmem:[%s11 + $0x1e0] sm:$0xff]
    %v276 = vld [vmem:[%s11 + $0x1e8] sm:$0xff]
    %v277 = vld [vmem:[%s11 + $0x1f0] sm:$0xff]
    %v278 = vld [vmem:[%s11 + $0x1f8] sm:$0xff]
    %v279 = vld [vmem:[%s11 + $0x200] sm:$0xff]
    %v280 = vld [vmem:[%s11 + $0x208] sm:$0xff]
    %v281 = vld [vmem:[%s11 + $0x210] sm:$0xff]
    %v282 = vld [vmem:[%s11 + $0x218] sm:$0xff]
    %v283 = vld [vmem:[%s11 + $0x220] sm:$0xff]
    %v284 = vld [vmem:[%s11 + $0x228] sm:$0xff]
    %v285 = vld [vmem:[%s11 + $0x230] sm:$0xff]
    %v286 = vld [vmem:[%s11 + $0x238] sm:$0xff]
    %v287 = vld [vmem:[%s11 + $0x240] sm:$0xff]
    %v288 = vld [vmem:[%s11 + $0x248] sm:$0xff]
    %v289 = vld [vmem:[%s11 + $0x250] sm:$0xff]
    %v290 = vld [vmem:[%s11 + $0x258] sm:$0xff]
    %v291 = vld [vmem:[%s11 + $0x260] sm:$0xff]
    %v292 = vld [vmem:[%s11 + $0x268] sm:$0xff]
    %v293 = vld [vmem:[%s11 + $0x270] sm:$0xff]
    %v294 = vld [vmem:[%s11 + $0x278] sm:$0xff]
    %v295 = vld [vmem:[%s11 + $0x280] sm:$0xff]
    %v296 = vld [vmem:[%s11 + $0x288] sm:$0xff]
    %v297 = vld [vmem:[%s11 + $0x290] sm:$0xff]
    %v298 = vld [vmem:[%s11 + $0x298] sm:$0xff]
    %v299 = vld [vmem:[%s11 + $0x2a0] sm:$0xff]
    %v300 = vld [vmem:[%s11 + $0x2a8] sm:$0xff]
    %v301 = vld [vmem:[%s11 + $0x2b0] sm:$0xff]
    %v302 = vld [vmem:[%s11 + $0x2b8] sm:$0xff]
    %v303 = vld [vmem:[%s11 + $0x2c0] sm:$0xff]
    %v304 = vld [vmem:[%s11 + $0x2c8] sm:$0xff]
    %v305 = vld [vmem:[%s11 + $0x2d0] sm:$0xff]
    %v306 = vld [vmem:[%s11 + $0x2d8] sm:$0xff]
    %v307 = vld [vmem:[%s11 + $0x2e0] sm:$0xff]
    %v308 = vld [vmem:[%s11 + $0x2e8] sm:$0xff]
    %v309 = vld [vmem:[%s11 + $0x2f0] sm:$0xff]
    %v310 = vld [vmem:[%s11 + $0x2f8] sm:$0xff]
    %v311 = vld [vmem:[%s13] sm:$0x1]
    %v313 = vlaneseq
    %v314 = vshrl.u32 %v313, 7
    %v315 = vsub.s32 0, %v314
    %v316 = vrot.slane %v311, %v315
    %v321 = vcombine.high %v212, %v212
    %v322 = vcombine.high %v213, %v213
    %v323 = vcombine.high %v214, %v214
    %327 = vmatprep.subr.mxu0 0.0
    %328 = vmatpush1.msra.mxu0 %v215
    %329 = vmatprep.subr.mxu0 0.0
    %330 = vmatpush1.msra.mxu0 %v216
    %331 = vmatprep.subr.mxu0 0.0
    %332 = vmatpush1.msra.mxu0 %v217
    %333 = vmatprep.subr.mxu0 0.0
    %334 = vmatpush1.msra.mxu0 %v218
    %335 = vmatprep.subr.mxu0 0.0
    %336 = vmatpush1.msra.mxu0 %v219
    %337 = vmatprep.subr.mxu0 0.0
    %338 = vmatpush1.msra.mxu0 %v220
    %339 = vmatprep.subr.mxu0 0.0
    %340 = vmatpush1.msra.mxu0 %v221
    %341 = vmatprep.subr.mxu0 0.0
    %342 = vmatpush1.msra.mxu0 %v222
    %343 = vmatprep.subr.mxu0 0.0
    %344 = vmatpush1.msra.mxu0 %v223
    %345 = vmatprep.subr.mxu0 0.0
    %346 = vmatpush1.msra.mxu0 %v224
    %347 = vmatprep.subr.mxu0 0.0
    %348 = vmatpush1.msra.mxu0 %v225
    %349 = vmatprep.subr.mxu0 0.0
    %350 = vmatpush1.msra.mxu0 %v226
    %351 = vmatprep.subr.mxu0 0.0
    %352 = vmatpush1.msra.mxu0 %v227
    %353 = vmatprep.subr.mxu0 0.0
    %354 = vmatpush1.msra.mxu0 %v228
    %355 = vmatprep.subr.mxu0 0.0
    %356 = vmatpush1.msra.mxu0 %v229
    %357 = vmatprep.subr.mxu0 0.0
    %358 = vmatpush1.msra.mxu0 %v230
    %359 = vmatprep.subr.mxu0 0.0
    %360 = vmatpush1.msra.mxu0 %v231
    %361 = vmatprep.subr.mxu0 0.0
    %362 = vmatpush1.msra.mxu0 %v232
    %363 = vmatprep.subr.mxu0 0.0
    %364 = vmatpush1.msra.mxu0 %v233
    %365 = vmatprep.subr.mxu0 0.0
    %366 = vmatpush1.msra.mxu0 %v234
    %367 = vmatprep.subr.mxu0 0.0
    %368 = vmatpush1.msra.mxu0 %v235
    %369 = vmatprep.subr.mxu0 0.0
    %370 = vmatpush1.msra.mxu0 %v236
    %371 = vmatprep.subr.mxu0 0.0
    %372 = vmatpush1.msra.mxu0 %v237
    %373 = vmatprep.subr.mxu0 0.0
    %374 = vmatpush1.msra.mxu0 %v238
    %375 = vmatprep.subr.mxu0 0.0
    %376 = vmatpush1.msra.mxu0 %v239
    %377 = vmatprep.subr.mxu0 0.0
    %378 = vmatpush1.msra.mxu0 %v240
    %379 = vmatprep.subr.mxu0 0.0
    %380 = vmatpush1.msra.mxu0 %v241
    %381 = vmatprep.subr.mxu0 0.0
    %382 = vmatpush1.msra.mxu0 %v242
    %383 = vmatprep.subr.mxu0 0.0
    %384 = vmatpush1.msra.mxu0 %v243
    %385 = vmatprep.subr.mxu0 0.0
    %386 = vmatpush1.msra.mxu0 %v244
    %387 = vmatprep.subr.mxu0 0.0
    %388 = vmatpush1.msra.mxu0 %v245
    %389 = vmatprep.subr.mxu0 0.0
    %390 = vmatpush1.msra.mxu0 %v246
    %391 = vmatprep.mubr.f32.mxu0 %v321
    %392 = vmatmul.mubr.f32.gmra.mrb[0].mxu0 %v212
    %v393 = vpop.f32.mrb[0].mxu0
    %v394 = vadd.f32 %v316, %v393
    %v395 = vpop.f32.mrb[0].mxu0
    %396 = vdwg.mxu0
    %397 = vmatprep.subr.mxu0 0.0
    %398 = vmatpush1.msra.mxu0 %v247
    %399 = vmatprep.subr.mxu0 0.0
    %400 = vmatpush1.msra.mxu0 %v248
    %401 = vmatprep.subr.mxu0 0.0
    %402 = vmatpush1.msra.mxu0 %v249
    %403 = vmatprep.subr.mxu0 0.0
    %404 = vmatpush1.msra.mxu0 %v250
    %405 = vmatprep.subr.mxu0 0.0
    %406 = vmatpush1.msra.mxu0 %v251
    %407 = vmatprep.subr.mxu0 0.0
    %408 = vmatpush1.msra.mxu0 %v252
    %409 = vmatprep.subr.mxu0 0.0
    %410 = vmatpush1.msra.mxu0 %v253
    %411 = vmatprep.subr.mxu0 0.0
    %412 = vmatpush1.msra.mxu0 %v254
    %413 = vmatprep.subr.mxu0 0.0
    %414 = vmatpush1.msra.mxu0 %v255
    %415 = vmatprep.subr.mxu0 0.0
    %416 = vmatpush1.msra.mxu0 %v256
    %417 = vmatprep.subr.mxu0 0.0
    %418 = vmatpush1.msra.mxu0 %v257
    %419 = vmatprep.subr.mxu0 0.0
    %420 = vmatpush1.msra.mxu0 %v258
    %421 = vmatprep.subr.mxu0 0.0
    %422 = vmatpush1.msra.mxu0 %v259
    %423 = vmatprep.subr.mxu0 0.0
    %424 = vmatpush1.msra.mxu0 %v260
    %425 = vmatprep.subr.mxu0 0.0
    %426 = vmatpush1.msra.mxu0 %v261
    %427 = vmatprep.subr.mxu0 0.0
    %428 = vmatpush1.msra.mxu0 %v262
    %429 = vmatprep.subr.mxu0 0.0
    %430 = vmatpush1.msra.mxu0 %v263
    %431 = vmatprep.subr.mxu0 0.0
    %432 = vmatpush1.msra.mxu0 %v264
    %433 = vmatprep.subr.mxu0 0.0
    %434 = vmatpush1.msra.mxu0 %v265
    %435 = vmatprep.subr.mxu0 0.0
    %436 = vmatpush1.msra.mxu0 %v266
    %437 = vmatprep.subr.mxu0 0.0
    %438 = vmatpush1.msra.mxu0 %v267
    %439 = vmatprep.subr.mxu0 0.0
    %440 = vmatpush1.msra.mxu0 %v268
    %441 = vmatprep.subr.mxu0 0.0
    %442 = vmatpush1.msra.mxu0 %v269
    %443 = vmatprep.subr.mxu0 0.0
    %444 = vmatpush1.msra.mxu0 %v270
    %445 = vmatprep.subr.mxu0 0.0
    %446 = vmatpush1.msra.mxu0 %v271
    %447 = vmatprep.subr.mxu0 0.0
    %448 = vmatpush1.msra.mxu0 %v272
    %449 = vmatprep.subr.mxu0 0.0
    %450 = vmatpush1.msra.mxu0 %v273
    %451 = vmatprep.subr.mxu0 0.0
    %452 = vmatpush1.msra.mxu0 %v274
    %453 = vmatprep.subr.mxu0 0.0
    %454 = vmatpush1.msra.mxu0 %v275
    %455 = vmatprep.subr.mxu0 0.0
    %456 = vmatpush1.msra.mxu0 %v276
    %457 = vmatprep.subr.mxu0 0.0
    %458 = vmatpush1.msra.mxu0 %v277
    %459 = vmatprep.subr.mxu0 0.0
    %460 = vmatpush1.msra.mxu0 %v278
    %461 = vmatprep.mubr.f32.mxu0 %v322
    %462 = vmatmul.mubr.f32.gmra.mrb[0].mxu0 %v213
    %v463 = vpop.f32.mrb[0].mxu0
    %v464 = vadd.f32 %v394, %v463
    %v465 = vpop.f32.mrb[0].mxu0
    %466 = vdwg.mxu0
    %467 = vmatprep.subr.mxu0 0.0
    %468 = vmatpush1.msra.mxu0 %v279
    %469 = vmatprep.subr.mxu0 0.0
    %470 = vmatpush1.msra.mxu0 %v280
    %471 = vmatprep.subr.mxu0 0.0
    %472 = vmatpush1.msra.mxu0 %v281
    %473 = vmatprep.subr.mxu0 0.0
    %474 = vmatpush1.msra.mxu0 %v282
    %475 = vmatprep.subr.mxu0 0.0
    %476 = vmatpush1.msra.mxu0 %v283
    %477 = vmatprep.subr.mxu0 0.0
    %478 = vmatpush1.msra.mxu0 %v284
    %479 = vmatprep.subr.mxu0 0.0
    %480 = vmatpush1.msra.mxu0 %v285
    %481 = vmatprep.subr.mxu0 0.0
    %482 = vmatpush1.msra.mxu0 %v286
    %483 = vmatprep.subr.mxu0 0.0
    %484 = vmatpush1.msra.mxu0 %v287
    %485 = vmatprep.subr.mxu0 0.0
    %486 = vmatpush1.msra.mxu0 %v288
    %487 = vmatprep.subr.mxu0 0.0
    %488 = vmatpush1.msra.mxu0 %v289
    %489 = vmatprep.subr.mxu0 0.0
    %490 = vmatpush1.msra.mxu0 %v290
    %491 = vmatprep.subr.mxu0 0.0
    %492 = vmatpush1.msra.mxu0 %v291
    %493 = vmatprep.subr.mxu0 0.0
    %494 = vmatpush1.msra.mxu0 %v292
    %495 = vmatprep.subr.mxu0 0.0
    %496 = vmatpush1.msra.mxu0 %v293
    %497 = vmatprep.subr.mxu0 0.0
    %498 = vmatpush1.msra.mxu0 %v294
    %499 = vmatprep.subr.mxu0 0.0
    %500 = vmatpush1.msra.mxu0 %v295
    %501 = vmatprep.subr.mxu0 0.0
    %502 = vmatpush1.msra.mxu0 %v296
    %503 = vmatprep.subr.mxu0 0.0
    %504 = vmatpush1.msra.mxu0 %v297
    %505 = vmatprep.subr.mxu0 0.0
    %506 = vmatpush1.msra.mxu0 %v298
    %507 = vmatprep.subr.mxu0 0.0
    %508 = vmatpush1.msra.mxu0 %v299
    %509 = vmatprep.subr.mxu0 0.0
    %510 = vmatpush1.msra.mxu0 %v300
    %511 = vmatprep.subr.mxu0 0.0
    %512 = vmatpush1.msra.mxu0 %v301
    %513 = vmatprep.subr.mxu0 0.0
    %514 = vmatpush1.msra.mxu0 %v302
    %515 = vmatprep.subr.mxu0 0.0
    %516 = vmatpush1.msra.mxu0 %v303
    %517 = vmatprep.subr.mxu0 0.0
    %518 = vmatpush1.msra.mxu0 %v304
    %519 = vmatprep.subr.mxu0 0.0
    %520 = vmatpush1.msra.mxu0 %v305
    %521 = vmatprep.subr.mxu0 0.0
    %522 = vmatpush1.msra.mxu0 %v306
    %523 = vmatprep.subr.mxu0 0.0
    %524 = vmatpush1.msra.mxu0 %v307
    %525 = vmatprep.subr.mxu0 0.0
    %526 = vmatpush1.msra.mxu0 %v308
    %527 = vmatprep.subr.mxu0 0.0
    %528 = vmatpush1.msra.mxu0 %v309
    %529 = vmatprep.subr.mxu0 0.0
    %530 = vmatpush1.msra.mxu0 %v310
    %531 = vmatprep.mubr.f32.mxu0 %v323
    %532 = vmatmul.mubr.f32.gmra.mrb[0].mxu0 %v214
    %v533 = vpop.f32.mrb[0].mxu0
    %v534 = vadd.f32 %v464, %v533
    %v535 = vpop.f32.mrb[0].mxu0
    %536 = vdwg.mxu0
    %v537 = vld [vmem:[%s25] sm:$0xff]
    %v538 = vld [vmem:[%s25 + $0x8] sm:$0xff]
    %v539 = vld [vmem:[%s25 + $0x10] sm:$0xff]
    %v540 = vld [vmem:[%s25 + $0x18] sm:$0xff]
    %v541 = vld [vmem:[%s27] sm:$0x1]
    %v543 = vlaneseq
    %v544 = vshrl.u32 %v543, 7
    %v545 = vsub.s32 0, %v544
    %v546 = vrot.slane %v541, %v545
    %vm548 = vcmask 261120
    %v550 = vsel %vm548, %v534, 0
    %552 = vmatprep.subr.mxu0 0.0
    %553 = vmatpush1.msra.mxu0 %v537
    %554 = vmatprep.subr.mxu0 0.0
    %555 = vmatpush1.msra.mxu0 %v538
    %556 = vmatprep.subr.mxu0 0.0
    %557 = vmatpush1.msra.mxu0 %v539
    %558 = vmatprep.subr.mxu0 0.0
    %559 = vmatpush1.msra.mxu0 %v540
    %560 = vmatprep.subr.mxu0 0.0
    %561 = vmatpush1.msra.mxu0 0.0
    %562 = vmatprep.subr.mxu0 0.0
    %563 = vmatpush1.msra.mxu0 0.0
    %564 = vmatprep.subr.mxu0 0.0
    %565 = vmatpush1.msra.mxu0 0.0
    %566 = vmatprep.subr.mxu0 0.0
    %567 = vmatpush1.msra.mxu0 0.0
    %568 = vmatprep.subr.mxu0 0.0
    %569 = vmatpush1.msra.mxu0 0.0
    %570 = vmatprep.subr.mxu0 0.0
    %571 = vmatpush1.msra.mxu0 0.0
    %572 = vmatprep.subr.mxu0 0.0
    %573 = vmatpush1.msra.mxu0 0.0
    %574 = vmatprep.subr.mxu0 0.0
    %575 = vmatpush1.msra.mxu0 0.0
    %576 = vmatprep.subr.mxu0 0.0
    %577 = vmatpush1.msra.mxu0 0.0
    %578 = vmatprep.subr.mxu0 0.0
    %579 = vmatpush1.msra.mxu0 0.0
    %580 = vmatprep.subr.mxu0 0.0
    %581 = vmatpush1.msra.mxu0 0.0
    %582 = vmatprep.subr.mxu0 0.0
    %583 = vmatpush1.msra.mxu0 0.0
    %584 = vmatprep.subr.mxu0 0.0
    %585 = vmatpush1.msra.mxu0 0.0
    %586 = vmatprep.subr.mxu0 0.0
    %587 = vmatpush1.msra.mxu0 0.0
    %588 = vmatprep.subr.mxu0 0.0
    %589 = vmatpush1.msra.mxu0 0.0
    %590 = vmatprep.subr.mxu0 0.0
    %591 = vmatpush1.msra.mxu0 0.0
    %592 = vmatprep.subr.mxu0 0.0
    %593 = vmatpush1.msra.mxu0 0.0
    %594 = vmatprep.subr.mxu0 0.0
    %595 = vmatpush1.msra.mxu0 0.0
    %596 = vmatprep.subr.mxu0 0.0
    %597 = vmatpush1.msra.mxu0 0.0
    %598 = vmatprep.subr.mxu0 0.0
    %599 = vmatpush1.msra.mxu0 0.0
    %600 = vmatprep.subr.mxu0 0.0
    %601 = vmatpush1.msra.mxu0 0.0
    %602 = vmatprep.subr.mxu0 0.0
    %603 = vmatpush1.msra.mxu0 0.0
    %604 = vmatprep.subr.mxu0 0.0
    %605 = vmatpush1.msra.mxu0 0.0
    %606 = vmatprep.subr.mxu0 0.0
    %607 = vmatpush1.msra.mxu0 0.0
    %608 = vmatprep.subr.mxu0 0.0
    %609 = vmatpush1.msra.mxu0 0.0
    %610 = vmatprep.subr.mxu0 0.0
    %611 = vmatpush1.msra.mxu0 0.0
    %612 = vmatprep.subr.mxu0 0.0
    %613 = vmatpush1.msra.mxu0 0.0
    %614 = vmatprep.subr.mxu0 0.0
    %615 = vmatpush1.msra.mxu0 0.0
    %616 = vmatprep.mubr.f32.mxu0 0.0
    %617 = vmatmul.mubr.f32.gmra.mrb[0].mxu0 %v550
    %v618 = vpop.f32.mrb[0].mxu0
    %v619 = vadd.f32 %v546, %v618
    %v620 = vpop.f32.mrb[0].mxu0
    %621 = vdwg.mxu0
    %v622 = vld [vmem:[%s29] sm:$0xff]
    %v623 = vld [vmem:[%s29 + $0x8] sm:$0xff]
    %v624 = vld [vmem:[%s29 + $0x10] sm:$0xff]
    %v625 = vld [vmem:[%s29 + $0x18] sm:$0xff]
    %v626 = vld [vmem:[%s31] sm:$0x1]
    %v628 = vlaneseq
    %v629 = vshrl.u32 %v628, 7
    %v630 = vsub.s32 0, %v629
    %v631 = vrot.slane %v626, %v630
    %v634 = vsel %vm548, %v619, 0
    %636 = vmatprep.subr.mxu0 0.0
    %637 = vmatpush1.msra.mxu0 %v622
    %638 = vmatprep.subr.mxu0 0.0
    %639 = vmatpush1.msra.mxu0 %v623
    %640 = vmatprep.subr.mxu0 0.0
    %641 = vmatpush1.msra.mxu0 %v624
    %642 = vmatprep.subr.mxu0 0.0
    %643 = vmatpush1.msra.mxu0 %v625
    %644 = vmatprep.subr.mxu0 0.0
    %645 = vmatpush1.msra.mxu0 0.0
    %646 = vmatprep.subr.mxu0 0.0
    %647 = vmatpush1.msra.mxu0 0.0
    %648 = vmatprep.subr.mxu0 0.0
    %649 = vmatpush1.msra.mxu0 0.0
    %650 = vmatprep.subr.mxu0 0.0
    %651 = vmatpush1.msra.mxu0 0.0
    %652 = vmatprep.subr.mxu0 0.0
    %653 = vmatpush1.msra.mxu0 0.0
    %654 = vmatprep.subr.mxu0 0.0
    %655 = vmatpush1.msra.mxu0 0.0
    %656 = vmatprep.subr.mxu0 0.0
    %657 = vmatpush1.msra.mxu0 0.0
    %658 = vmatprep.subr.mxu0 0.0
    %659 = vmatpush1.msra.mxu0 0.0
    %660 = vmatprep.subr.mxu0 0.0
    %661 = vmatpush1.msra.mxu0 0.0
    %662 = vmatprep.subr.mxu0 0.0
    %663 = vmatpush1.msra.mxu0 0.0
    %664 = vmatprep.subr.mxu0 0.0
    %665 = vmatpush1.msra.mxu0 0.0
    %666 = vmatprep.subr.mxu0 0.0
    %667 = vmatpush1.msra.mxu0 0.0
    %668 = vmatprep.subr.mxu0 0.0
    %669 = vmatpush1.msra.mxu0 0.0
    %670 = vmatprep.subr.mxu0 0.0
    %671 = vmatpush1.msra.mxu0 0.0
    %672 = vmatprep.subr.mxu0 0.0
    %673 = vmatpush1.msra.mxu0 0.0
    %674 = vmatprep.subr.mxu0 0.0
    %675 = vmatpush1.msra.mxu0 0.0
    %676 = vmatprep.subr.mxu0 0.0
    %677 = vmatpush1.msra.mxu0 0.0
    %678 = vmatprep.subr.mxu0 0.0
    %679 = vmatpush1.msra.mxu0 0.0
    %680 = vmatprep.subr.mxu0 0.0
    %681 = vmatpush1.msra.mxu0 0.0
    %682 = vmatprep.subr.mxu0 0.0
    %683 = vmatpush1.msra.mxu0 0.0
    %684 = vmatprep.subr.mxu0 0.0
    %685 = vmatpush1.msra.mxu0 0.0
    %686 = vmatprep.subr.mxu0 0.0
    %687 = vmatpush1.msra.mxu0 0.0
    %688 = vmatprep.subr.mxu0 0.0
    %689 = vmatpush1.msra.mxu0 0.0
    %690 = vmatprep.subr.mxu0 0.0
    %691 = vmatpush1.msra.mxu0 0.0
    %692 = vmatprep.subr.mxu0 0.0
    %693 = vmatpush1.msra.mxu0 0.0
    %694 = vmatprep.subr.mxu0 0.0
    %695 = vmatpush1.msra.mxu0 0.0
    %696 = vmatprep.subr.mxu0 0.0
    %697 = vmatpush1.msra.mxu0 0.0
    %698 = vmatprep.subr.mxu0 0.0
    %699 = vmatpush1.msra.mxu0 0.0
    %700 = vmatprep.mubr.f32.mxu0 0.0
    %701 = vmatmul.mubr.f32.gmra.mrb[0].mxu0 %v634
    %v702 = vpop.f32.mrb[0].mxu0
    %v703 = vadd.f32 %v631, %v702
    %v704 = vpop.f32.mrb[0].mxu0
    %705 = vdwg.mxu0
    %vm706 = vcmask 257024
    %707 = vst.msk [vmem:[#allocation4] sm:$0xf] %vm706, %v703
    %708 = vst.msk [vmem:[#allocation5] sm:$0xf] %vm706, 0.0
    %709 = vst.msk [vmem:[#allocation6] sm:$0xf] %vm706, 0.0
    %v710 = vlaneseq
    %v711 = vand.u32 %v710, 127
    %v712 = vld [vmem:[%s9] sm:$0xf]
    %v713 = vld [vmem:[%s5] sm:$0x1]
    loop: start=0, step=1, limit=4
    $region122: #{faceformer_forward.1} parent=1 // loop_pre_header
      _
    $region123: #{faceformer_forward.1} parent=1 // loop_header
      %s715 = sphi 0, %s719
      %p716 = scmp.ge.s32.totalorder %s715, 4
    $region124: #{faceformer_forward.1} parent=1 // loop_header_branch
      %718 = sbr.rel (%p716) target = $region128
    $region125: #{faceformer_forward.1} parent=1 // loop_body
      %v720 = vld [vmem:[#allocation2] sm:$0x1]
      %s721 = scalar_lea.vmem %s7, %s715
      %v722 = vld [vmem:[%s721] sm:$0x1]
      %v723 = vadd.f32 %v720, %v722
      %v724 = vld [vmem:[%s17] sm:$0xff]
      %v725 = vld [vmem:[%s17 + $0x8] sm:$0xff]
      %v726 = vld [vmem:[%s17 + $0x10] sm:$0xff]
      %v727 = vld [vmem:[%s17 + $0x18] sm:$0xff]
      %v728 = vld [vmem:[%s19] sm:$0x1]
      %v730 = vsel %vm548, %v723, 0
      %732 = vmatprep.subr.mxu0 0.0
      %733 = vmatpush1.msra.mxu0 %v724
      %734 = vmatprep.subr.mxu0 0.0
      %735 = vmatpush1.msra.mxu0 %v725
      %736 = vmatprep.subr.mxu0 0.0
      %737 = vmatpush1.msra.mxu0 %v726
      %738 = vmatprep.subr.mxu0 0.0
      %739 = vmatpush1.msra.mxu0 %v727
      %740 = vmatprep.subr.mxu0 0.0
      %741 = vmatpush1.msra.mxu0 0.0
      %742 = vmatprep.subr.mxu0 0.0
      %743 = vmatpush1.msra.mxu0 0.0
      %744 = vmatprep.subr.mxu0 0.0
      %745 = vmatpush1.msra.mxu0 0.0
      %746 = vmatprep.subr.mxu0 0.0
      %747 = vmatpush1.msra.mxu0 0.0
      %748 = vmatprep.subr.mxu0 0.0
      %749 = vmatpush1.msra.mxu0 0.0
      %750 = vmatprep.subr.mxu0 0.0
      %751 = vmatpush1.msra.mxu0 0.0
      %752 = vmatprep.subr.mxu0 0.0
      %753 = vmatpush1.msra.mxu0 0.0
      %754 = vmatprep.subr.mxu0 0.0
      %755 = vmatpush1.msra.mxu0 0.0
      %756 = vmatprep.subr.mxu0 0.0
      %757 = vmatpush1.msra.mxu0 0.0
      %758 = vmatprep.subr.mxu0 0.0
      %759 = vmatpush1.msra.mxu0 0.0
      %760 = vmatprep.subr.mxu0 0.0
      %761 = vmatpush1.msra.mxu0 0.0
      %762 = vmatprep.subr.mxu0 0.0
      %763 = vmatpush1.msra.mxu0 0.0
      %764 = vmatprep.subr.mxu0 0.0
      %765 = vmatpush1.msra.mxu0 0.0
      %766 = vmatprep.subr.mxu0 0.0
      %767 = vmatpush1.msra.mxu0 0.0
      %768 = vmatprep.subr.mxu0 0.0
      %769 = vmatpush1.msra.mxu0 0.0
      %770 = vmatprep.subr.mxu0 0.0
      %771 = vmatpush1.msra.mxu0 0.0
      %772 = vmatprep.subr.mxu0 0.0
      %773 = vmatpush1.msra.mxu0 0.0
      %774 = vmatprep.subr.mxu0 0.0
      %775 = vmatpush1.msra.mxu0 0.0
      %776 = vmatprep.subr.mxu0 0.0
      %777 = vmatpush1.msra.mxu0 0.0
      %778 = vmatprep.subr.mxu0 0.0
      %779 = vmatpush1.msra.mxu0 0.0
      %780 = vmatprep.subr.mxu0 0.0
      %781 = vmatpush1.msra.mxu0 0.0
      %782 = vmatprep.subr.mxu0 0.0
      %783 = vmatpush1.msra.mxu0 0.0
      %784 = vmatprep.subr.mxu0 0.0
      %785 = vmatpush1.msra.mxu0 0.0
      %786 = vmatprep.subr.mxu0 0.0
      %787 = vmatpush1.msra.mxu0 0.0
      %788 = vmatprep.subr.mxu0 0.0
      %789 = vmatpush1.msra.mxu0 0.0
      %790 = vmatprep.subr.mxu0 0.0
      %791 = vmatpush1.msra.mxu0 0.0
      %792 = vmatprep.subr.mxu0 0.0
      %793 = vmatpush1.msra.mxu0 0.0
      %794 = vmatprep.subr.mxu0 0.0
      %795 = vmatpush1.msra.mxu0 0.0
      %796 = vmatprep.mubr.f32.mxu0 0.0
      %797 = vmatmul.mubr.f32.gmra.mrb[0].mxu0 %v730
      %v798 = vpop.f32.mrb[0].mxu0
      %v799 = vadd.f32 %v728, %v798
      %v800 = vpop.f32.mrb[0].mxu0
      %801 = vdwg.mxu0
      %803 = vrot.lane.b32.xlu0 %v799, 96
      %v804 = vpop.permute.xlu0 %803
      %s806 = scalar_lea.vmem [#allocation5], %s715
      %807 = vst.msk [vmem:[%s806] sm:$0x1] %vm207, %v804
      %808 = vrot.lane.b32.xlu0 %v799, 64
      %v809 = vpop.permute.xlu0 %808
      %s811 = scalar_lea.vmem [#allocation6], %s715
      %812 = vst.msk [vmem:[%s811] sm:$0x1] %vm207, %v809
      %v813 = vld [vmem:[#allocation5] sm:$0xf]
      %v814 = vld [vmem:[#allocation6] sm:$0xf]
      %vm815 = vcmask 64512
      %v816 = vsel %vm815, %v799, 0
      %v819 = vsel %vm815, %v813, 0
      %821 = vmatprep.subr.mxu0 0.0
      %822 = vmatpush1.xpose.msra.mxu0 %v819
      %823 = vmatprep.subr.mxu0 0.0
      %824 = vmatpush1.xpose.msra.mxu0 0.0
      %825 = vmatprep.subr.mxu0 0.0
      %826 = vmatpush1.xpose.msra.mxu0 0.0
      %827 = vmatprep.subr.mxu0 0.0
      %828 = vmatpush1.xpose.msra.mxu0 0.0
      %829 = vmatprep.subr.mxu0 0.0
      %830 = vmatpush1.xpose.msra.mxu0 0.0
      %831 = vmatprep.subr.mxu0 0.0
      %832 = vmatpush1.xpose.msra.mxu0 0.0
      %833 = vmatprep.subr.mxu0 0.0
      %834 = vmatpush1.xpose.msra.mxu0 0.0
      %835 = vmatprep.subr.mxu0 0.0
      %836 = vmatpush1.xpose.msra.mxu0 0.0
      %837 = vmatprep.subr.mxu0 0.0
      %838 = vmatpush1.xpose.msra.mxu0 0.0
      %839 = vmatprep.subr.mxu0 0.0
      %840 = vmatpush1.xpose.msra.mxu0 0.0
      %841 = vmatprep.subr.mxu0 0.0
      %842 = vmatpush1.xpose.msra.mxu0 0.0
      %843 = vmatprep.subr.mxu0 0.0
      %844 = vmatpush1.xpose.msra.mxu0 0.0
      %845 = vmatprep.subr.mxu0 0.0
      %846 = vmatpush1.xpose.msra.mxu0 0.0
      %847 = vmatprep.subr.mxu0 0.0
      %848 = vmatpush1.xpose.msra.mxu0 0.0
      %849 = vmatprep.subr.mxu0 0.0
      %850 = vmatpush1.xpose.msra.mxu0 0.0
      %851 = vmatprep.subr.mxu0 0.0
      %852 = vmatpush1.xpose.msra.mxu0 0.0
      %853 = vmatprep.subr.mxu0 0.0
      %854 = vmatpush1.xpose.msra.mxu0 0.0
      %855 = vmatprep.subr.mxu0 0.0
      %856 = vmatpush1.xpose.msra.mxu0 0.0
      %857 = vmatprep.subr.mxu0 0.0
      %858 = vmatpush1.xpose.msra.mxu0 0.0
      %859 = vmatprep.subr.mxu0 0.0
      %860 = vmatpush1.xpose.msra.mxu0 0.0
      %861 = vmatprep.subr.mxu0 0.0
      %862 = vmatpush1.xpose.msra.mxu0 0.0
      %863 = vmatprep.subr.mxu0 0.0
      %864 = vmatpush1.xpose.msra.mxu0 0.0
      %865 = vmatprep.subr.mxu0 0.0
      %866 = vmatpush1.xpose.msra.mxu0 0.0
      %867 = vmatprep.subr.mxu0 0.0
      %868 = vmatpush1.xpose.msra.mxu0 0.0
      %869 = vmatprep.subr.mxu0 0.0
      %870 = vmatpush1.xpose.msra.mxu0 0.0
      %871 = vmatprep.subr.mxu0 0.0
      %872 = vmatpush1.xpose.msra.mxu0 0.0
      %873 = vmatprep.subr.mxu0 0.0
      %874 = vmatpush1.xpose.msra.mxu0 0.0
      %875 = vmatprep.subr.mxu0 0.0
      %876 = vmatpush1.xpose.msra.mxu0 0.0
      %877 = vmatprep.subr.mxu0 0.0
      %878 = vmatpush1.xpose.msra.mxu0 0.0
      %879 = vmatprep.subr.mxu0 0.0
      %880 = vmatpush1.xpose.msra.mxu0 0.0
      %881 = vmatprep.subr.mxu0 0.0
      %882 = vmatpush1.xpose.msra.mxu0 0.0
      %883 = vmatprep.subr.mxu0 0.0
      %884 = vmatpush1.xpose.msra.mxu0 0.0
      %885 = vmatprep.mubr.f32.mxu0 0.0
      %886 = vmatmul.mubr.f32.gmra.mrb[0].mxu0 %v816
      %v887 = vpop.f32.mrb[0].mxu0
      %v888 = vadd.f32 0.0, %v887
      %v889 = vpop.f32.mrb[0].mxu0
      %890 = vdwg.mxu0
      %891 = vrot.lane.b32.xlu0 %v799, 120
      %v892 = vpop.permute.xlu0 %891
      %893 = vrot.lane.b32.xlu0 %v813, 120
      %v894 = vpop.permute.xlu0 %893
      %v895 = vsel %vm815, %v892, 0
      %v897 = vsel %vm815, %v894, 0
      %899 = vmatprep.subr.mxu0 0.0
      %900 = vmatpush1.xpose.msra.mxu0 %v897
      %901 = vmatprep.subr.mxu0 0.0
      %902 = vmatpush1.xpose.msra.mxu0 0.0
      %903 = vmatprep.subr.mxu0 0.0
      %904 = vmatpush1.xpose.msra.mxu0 0.0
      %905 = vmatprep.subr.mxu0 0.0
      %906 = vmatpush1.xpose.msra.mxu0 0.0
      %907 = vmatprep.subr.mxu0 0.0
      %908 = vmatpush1.xpose.msra.mxu0 0.0
      %909 = vmatprep.subr.mxu0 0.0
      %910 = vmatpush1.xpose.msra.mxu0 0.0
      %911 = vmatprep.subr.mxu0 0.0
      %912 = vmatpush1.xpose.msra.mxu0 0.0
      %913 = vmatprep.subr.mxu0 0.0
      %914 = vmatpush1.xpose.msra.mxu0 0.0
      %915 = vmatprep.subr.mxu0 0.0
      %916 = vmatpush1.xpose.msra.mxu0 0.0
      %917 = vmatprep.subr.mxu0 0.0
      %918 = vmatpush1.xpose.msra.mxu0 0.0
      %919 = vmatprep.subr.mxu0 0.0
      %920 = vmatpush1.xpose.msra.mxu0 0.0
      %921 = vmatprep.subr.mxu0 0.0
      %922 = vmatpush1.xpose.msra.mxu0 0.0
      %923 = vmatprep.subr.mxu0 0.0
      %924 = vmatpush1.xpose.msra.mxu0 0.0
      %925 = vmatprep.subr.mxu0 0.0
      %926 = vmatpush1.xpose.msra.mxu0 0.0
      %927 = vmatprep.subr.mxu0 0.0
      %928 = vmatpush1.xpose.msra.mxu0 0.0
      %929 = vmatprep.subr.mxu0 0.0
      %930 = vmatpush1.xpose.msra.mxu0 0.0
      %931 = vmatprep.subr.mxu0 0.0
      %932 = vmatpush1.xpose.msra.mxu0 0.0
      %933 = vmatprep.subr.mxu0 0.0
      %934 = vmatpush1.xpose.msra.mxu0 0.0
      %935 = vmatprep.subr.mxu0 0.0
      %936 = vmatpush1.xpose.msra.mxu0 0.0
      %937 = vmatprep.subr.mxu0 0.0
      %938 = vmatpush1.xpose.msra.mxu0 0.0
      %939 = vmatprep.subr.mxu0 0.0
      %940 = vmatpush1.xpose.msra.mxu0 0.0
      %941 = vmatprep.subr.mxu0 0.0
      %942 = vmatpush1.xpose.msra.mxu0 0.0
      %943 = vmatprep.subr.mxu0 0.0
      %944 = vmatpush1.xpose.msra.mxu0 0.0
      %945 = vmatprep.subr.mxu0 0.0
      %946 = vmatpush1.xpose.msra.mxu0 0.0
      %947 = vmatprep.subr.mxu0 0.0
      %948 = vmatpush1.xpose.msra.mxu0 0.0
      %949 = vmatprep.subr.mxu0 0.0
      %950 = vmatpush1.xpose.msra.mxu0 0.0
      %951 = vmatprep.subr.mxu0 0.0
      %952 = vmatpush1.xpose.msra.mxu0 0.0
      %953 = vmatprep.subr.mxu0 0.0
      %954 = vmatpush1.xpose.msra.mxu0 0.0
      %955 = vmatprep.subr.mxu0 0.0
      %956 = vmatpush1.xpose.msra.mxu0 0.0
      %957 = vmatprep.subr.mxu0 0.0
      %958 = vmatpush1.xpose.msra.mxu0 0.0
      %959 = vmatprep.subr.mxu0 0.0
      %960 = vmatpush1.xpose.msra.mxu0 0.0
      %961 = vmatprep.subr.mxu0 0.0
      %962 = vmatpush1.xpose.msra.mxu0 0.0
      %963 = vmatprep.mubr.f32.mxu0 0.0
      %964 = vmatmul.mubr.f32.gmra.mrb[0].mxu0 %v895
      %v965 = vpop.f32.mrb[0].mxu0
      %v966 = vadd.f32 0.0, %v965
      %v967 = vpop.f32.mrb[0].mxu0
      %968 = vdwg.mxu0
      %969 = vrot.lane.b32.xlu0 %v799, 112
      %v970 = vpop.permute.xlu0 %969
      %971 = vrot.lane.b32.xlu0 %v813, 112
      %v972 = vpop.permute.xlu0 %971
      %v973 = vsel %vm815, %v970, 0
      %v975 = vsel %vm815, %v972, 0
      %977 = vmatprep.subr.mxu0 0.0
      %978 = vmatpush1.xpose.msra.mxu0 %v975
      %979 = vmatprep.subr.mxu0 0.0
      %980 = vmatpush1.xpose.msra.mxu0 0.0
      %981 = vmatprep.subr.mxu0 0.0
      %982 = vmatpush1.xpose.msra.mxu0 0.0
      %983 = vmatprep.subr.mxu0 0.0
      %984 = vmatpush1.xpose.msra.mxu0 0.0
      %985 = vmatprep.subr.mxu0 0.0
      %986 = vmatpush1.xpose.msra.mxu0 0.0
      %987 = vmatprep.subr.mxu0 0.0
      %988 = vmatpush1.xpose.msra.mxu0 0.0
      %989 = vmatprep.subr.mxu0 0.0
      %990 = vmatpush1.xpose.msra.mxu0 0.0
      %991 = vmatprep.subr.mxu0 0.0
      %992 = vmatpush1.xpose.msra.mxu0 0.0
      %993 = vmatprep.subr.mxu0 0.0
      %994 = vmatpush1.xpose.msra.mxu0 0.0
      %995 = vmatprep.subr.mxu0 0.0
      %996 = vmatpush1.xpose.msra.mxu0 0.0
      %997 = vmatprep.subr.mxu0 0.0
      %998 = vmatpush1.xpose.msra.mxu0 0.0
      %999 = vmatprep.subr.mxu0 0.0
      %1000 = vmatpush1.xpose.msra.mxu0 0.0
      %1001 = vmatprep.subr.mxu0 0.0
      %1002 = vmatpush1.xpose.msra.mxu0 0.0
      %1003 = vmatprep.subr.mxu0 0.0
      %1004 = vmatpush1.xpose.msra.mxu0 0.0
      %1005 = vmatprep.subr.mxu0 0.0
      %1006 = vmatpush1.xpose.msra.mxu0 0.0
      %1007 = vmatprep.subr.mxu0 0.0
      %1008 = vmatpush1.xpose.msra.mxu0 0.0
      %1009 = vmatprep.subr.mxu0 0.0
      %1010 = vmatpush1.xpose.msra.mxu0 0.0
      %1011 = vmatprep.subr.mxu0 0.0
      %1012 = vmatpush1.xpose.msra.mxu0 0.0
      %1013 = vmatprep.subr.mxu0 0.0
      %1014 = vmatpush1.xpose.msra.mxu0 0.0
      %1015 = vmatprep.subr.mxu0 0.0
      %1016 = vmatpush1.xpose.msra.mxu0 0.0
      %1017 = vmatprep.subr.mxu0 0.0
      %1018 = vmatpush1.xpose.msra.mxu0 0.0
      %1019 = vmatprep.subr.mxu0 0.0
      %1020 = vmatpush1.xpose.msra.mxu0 0.0
      %1021 = vmatprep.subr.mxu0 0.0
      %1022 = vmatpush1.xpose.msra.mxu0 0.0
      %1023 = vmatprep.subr.mxu0 0.0
      %1024 = vmatpush1.xpose.msra.mxu0 0.0
      %1025 = vmatprep.subr.mxu0 0.0
      %1026 = vmatpush1.xpose.msra.mxu0 0.0
      %1027 = vmatprep.subr.mxu0 0.0
      %1028 = vmatpush1.xpose.msra.mxu0 0.0
      %1029 = vmatprep.subr.mxu0 0.0
      %1030 = vmatpush1.xpose.msra.mxu0 0.0
      %1031 = vmatprep.subr.mxu0 0.0
      %1032 = vmatpush1.xpose.msra.mxu0 0.0
      %1033 = vmatprep.subr.mxu0 0.0
      %1034 = vmatpush1.xpose.msra.mxu0 0.0
      %1035 = vmatprep.subr.mxu0 0.0
      %1036 = vmatpush1.xpose.msra.mxu0 0.0
      %1037 = vmatprep.subr.mxu0 0.0
      %1038 = vmatpush1.xpose.msra.mxu0 0.0
      %1039 = vmatprep.subr.mxu0 0.0
      %1040 = vmatpush1.xpose.msra.mxu0 0.0
      %1041 = vmatprep.mubr.f32.mxu0 0.0
      %1042 = vmatmul.mubr.f32.gmra.mrb[0].mxu0 %v973
      %v1043 = vpop.f32.mrb[0].mxu0
      %v1044 = vadd.f32 0.0, %v1043
      %v1045 = vpop.f32.mrb[0].mxu0
      %1046 = vdwg.mxu0
      %1047 = vrot.lane.b32.xlu0 %v799, 104
      %v1048 = vpop.permute.xlu0 %1047
      %1049 = vrot.lane.b32.xlu0 %v813, 104
      %v1050 = vpop.permute.xlu0 %1049
      %v1051 = vsel %vm815, %v1048, 0
      %v1053 = vsel %vm815, %v1050, 0
      %1055 = vmatprep.subr.mxu0 0.0
      %1056 = vmatpush1.xpose.msra.mxu0 %v1053
      %1057 = vmatprep.subr.mxu0 0.0
      %1058 = vmatpush1.xpose.msra.mxu0 0.0
      %1059 = vmatprep.subr.mxu0 0.0
      %1060 = vmatpush1.xpose.msra.mxu0 0.0
      %1061 = vmatprep.subr.mxu0 0.0
      %1062 = vmatpush1.xpose.msra.mxu0 0.0
      %1063 = vmatprep.subr.mxu0 0.0
      %1064 = vmatpush1.xpose.msra.mxu0 0.0
      %1065 = vmatprep.subr.mxu0 0.0
      %1066 = vmatpush1.xpose.msra.mxu0 0.0
      %1067 = vmatprep.subr.mxu0 0.0
      %1068 = vmatpush1.xpose.msra.mxu0 0.0
      %1069 = vmatprep.subr.mxu0 0.0
      %1070 = vmatpush1.xpose.msra.mxu0 0.0
      %1071 = vmatprep.subr.mxu0 0.0
      %1072 = vmatpush1.xpose.msra.mxu0 0.0
      %1073 = vmatprep.subr.mxu0 0.0
      %1074 = vmatpush1.xpose.msra.mxu0 0.0
      %1075 = vmatprep.subr.mxu0 0.0
      %1076 = vmatpush1.xpose.msra.mxu0 0.0
      %1077 = vmatprep.subr.mxu0 0.0
      %1078 = vmatpush1.xpose.msra.mxu0 0.0
      %1079 = vmatprep.subr.mxu0 0.0
      %1080 = vmatpush1.xpose.msra.mxu0 0.0
      %1081 = vmatprep.subr.mxu0 0.0
      %1082 = vmatpush1.xpose.msra.mxu0 0.0
      %1083 = vmatprep.subr.mxu0 0.0
      %1084 = vmatpush1.xpose.msra.mxu0 0.0
      %1085 = vmatprep.subr.mxu0 0.0
      %1086 = vmatpush1.xpose.msra.mxu0 0.0
      %1087 = vmatprep.subr.mxu0 0.0
      %1088 = vmatpush1.xpose.msra.mxu0 0.0
      %1089 = vmatprep.subr.mxu0 0.0
      %1090 = vmatpush1.xpose.msra.mxu0 0.0
      %1091 = vmatprep.subr.mxu0 0.0
      %1092 = vmatpush1.xpose.msra.mxu0 0.0
      %1093 = vmatprep.subr.mxu0 0.0
      %1094 = vmatpush1.xpose.msra.mxu0 0.0
      %1095 = vmatprep.subr.mxu0 0.0
      %1096 = vmatpush1.xpose.msra.mxu0 0.0
      %1097 = vmatprep.subr.mxu0 0.0
      %1098 = vmatpush1.xpose.msra.mxu0 0.0
      %1099 = vmatprep.subr.mxu0 0.0
      %1100 = vmatpush1.xpose.msra.mxu0 0.0
      %1101 = vmatprep.subr.mxu0 0.0
      %1102 = vmatpush1.xpose.msra.mxu0 0.0
      %1103 = vmatprep.subr.mxu0 0.0
      %1104 = vmatpush1.xpose.msra.mxu0 0.0
      %1105 = vmatprep.subr.mxu0 0.0
      %1106 = vmatpush1.xpose.msra.mxu0 0.0
      %1107 = vmatprep.subr.mxu0 0.0
      %1108 = vmatpush1.xpose.msra.mxu0 0.0
      %1109 = vmatprep.subr.mxu0 0.0
      %1110 = vmatpush1.xpose.msra.mxu0 0.0
      %1111 = vmatprep.subr.mxu0 0.0
      %1112 = vmatpush1.xpose.msra.mxu0 0.0
      %1113 = vmatprep.subr.mxu0 0.0
      %1114 = vmatpush1.xpose.msra.mxu0 0.0
      %1115 = vmatprep.subr.mxu0 0.0
      %1116 = vmatpush1.xpose.msra.mxu0 0.0
      %1117 = vmatprep.subr.mxu0 0.0
      %1118 = vmatpush1.xpose.msra.mxu0 0.0
      %1119 = vmatprep.mubr.f32.mxu0 0.0
      %1120 = vmatmul.mubr.f32.gmra.mrb[0].mxu0 %v1051
      %v1121 = vpop.f32.mrb[0].mxu0
      %v1122 = vadd.f32 0.0, %v1121
      %v1123 = vpop.f32.mrb[0].mxu0
      %1124 = vdwg.mxu0
      %v1126 = vrot.slane %v966, 7
      %v1129 = vrot.slane %v1044, 6
      %v1132 = vrot.slane %v1122, 5
      %vm1134 = vcmask 1040384
      %v1135 = vsel %vm1134, %v888, %v1126
      %v1136 = vsel %vm133, %v1135, %v1129
      %vm1137 = vcmask 1042432
      %v1138 = vsel %vm1137, %v1136, %v1132
      %v1139 = vstv %s715
      %v1140 = vsub.s32 %v1139, %v711
      %v1141 = vcvt.s32.f32 %v1140
      %v1142 = vrcp.pop 8.0
      %v1143 = vmul.f32 %v1141, %v1142
      %v1144 = vfloor.f32 %v1143
      %v1145 = vsub.f32 0.0, %v1144
      %1147 = vset.pattern.permute.xlu0 0
      %1148 = vperm.xlu0 %1147, %v712
      %v1149 = vpop.permute.xlu0 %1148
      %v1151 = vmul.f32 %v1145, %v1149
      %v1152 = vadd.f32 %v1138, %v1151
      %vm1153 = vcmp.gt.s32.totalorder %v711, %v1139
      %v1154 = vsel %vm1153, -1e+30, 0.0
      %v1155 = vadd.f32 %v1152, %v1154
      %vm1156 = vcmask 27648
      %v1157 = vsel %vm1156, %v1155, -inf
      %1158 = vmax.xlane.f32.xlu0 %v1157
      %v1159 = vpop.xlane.xlu0 %1158
      %v1160 = vsub.f32 %v1155, %v1159
      %v1161 = vmul.f32 %v1160, 1.442695
      %v1162 = vpow.pop %v1161
      %v1163 = vsel %vm1156, %v1162, 0.0
      %1164 = vadd.xlane.f32.xlu0 %v1163
      %v1165 = vpop.xlane.xlu0 %1164
      %v1166 = vrcp.pop %v1165
      %v1167 = vmul.f32 %v1162, %v1166
      %vm1168 = vcmask 31744
      %v1170 = vsel %vm1168, %v1167, 0
      %vm1172 = vcmask 1043456
      %v1174 = vsel %vm1172, %v814, 0
      %1176 = vmatprep.subr.mxu0 0.0
      %1177 = vmatpush1.msra.mxu0 %v1174
      %1178 = vmatprep.subr.mxu0 0.0
      %1179 = vmatpush1.msra.mxu0 0.0
      %1180 = vmatprep.subr.mxu0 0.0
      %1181 = vmatpush1.msra.mxu0 0.0
      %1182 = vmatprep.subr.mxu0 0.0
      %1183 = vmatpush1.msra.mxu0 0.0
      %1184 = vmatprep.subr.mxu0 0.0
      %1185 = vmatpush1.msra.mxu0 0.0
      %1186 = vmatprep.subr.mxu0 0.0
      %1187 = vmatpush1.msra.mxu0 0.0
      %1188 = vmatprep.subr.mxu0 0.0
      %1189 = vmatpush1.msra.mxu0 0.0
      %1190 = vmatprep.subr.mxu0 0.0
      %1191 = vmatpush1.msra.mxu0 0.0
      %1192 = vmatprep.subr.mxu0 0.0
      %1193 = vmatpush1.msra.mxu0 0.0
      %1194 = vmatprep.subr.mxu0 0.0
      %1195 = vmatpush1.msra.mxu0 0.0
      %1196 = vmatprep.subr.mxu0 0.0
      %1197 = vmatpush1.msra.mxu0 0.0
      %1198 = vmatprep.subr.mxu0 0.0
      %1199 = vmatpush1.msra.mxu0 0.0
      %1200 = vmatprep.subr.mxu0 0.0
      %1201 = vmatpush1.msra.mxu0 0.0
      %1202 = vmatprep.subr.mxu0 0.0
      %1203 = vmatpush1.msra.mxu0 0.0
      %1204 = vmatprep.subr.mxu0 0.0
      %1205 = vmatpush1.msra.mxu0 0.0
      %1206 = vmatprep.subr.mxu0 0.0
      %1207 = vmatpush1.msra.mxu0 0.0
      %1208 = vmatprep.subr.mxu0 0.0
      %1209 = vmatpush1.msra.mxu0 0.0
      %1210 = vmatprep.subr.mxu0 0.0
      %1211 = vmatpush1.msra.mxu0 0.0
      %1212 = vmatprep.subr.mxu0 0.0
      %1213 = vmatpush1.msra.mxu0 0.0
      %1214 = vmatprep.subr.mxu0 0.0
      %1215 = vmatpush1.msra.mxu0 0.0
      %1216 = vmatprep.subr.mxu0 0.0
      %1217 = vmatpush1.msra.mxu0 0.0
      %1218 = vmatprep.subr.mxu0 0.0
      %1219 = vmatpush1.msra.mxu0 0.0
      %1220 = vmatprep.subr.mxu0 0.0
      %1221 = vmatpush1.msra.mxu0 0.0
      %1222 = vmatprep.subr.mxu0 0.0
      %1223 = vmatpush1.msra.mxu0 0.0
      %1224 = vmatprep.subr.mxu0 0.0
      %1225 = vmatpush1.msra.mxu0 0.0
      %1226 = vmatprep.subr.mxu0 0.0
      %1227 = vmatpush1.msra.mxu0 0.0
      %1228 = vmatprep.subr.mxu0 0.0
      %1229 = vmatpush1.msra.mxu0 0.0
      %1230 = vmatprep.subr.mxu0 0.0
      %1231 = vmatpush1.msra.mxu0 0.0
      %1232 = vmatprep.subr.mxu0 0.0
      %1233 = vmatpush1.msra.mxu0 0.0
      %1234 = vmatprep.subr.mxu0 0.0
      %1235 = vmatpush1.msra.mxu0 0.0
      %1236 = vmatprep.subr.mxu0 0.0
      %1237 = vmatpush1.msra.mxu0 0.0
      %1238 = vmatprep.subr.mxu0 0.0
      %1239 = vmatpush1.msra.mxu0 0.0
      %1240 = vmatprep.mubr.f32.mxu0 0.0
      %1241 = vmatmul.mubr.f32.gmra.mrb[0].mxu0 %v1170
      %v1242 = vpop.f32.mrb[0].mxu0
      %v1243 = vadd.f32 0.0, %v1242
      %v1244 = vpop.f32.mrb[0].mxu0
      %1245 = vdwg.mxu0
      %v1246 = vrot.slane %v1167, 1
      %1247 = vrot.lane.b32.xlu0 %v814, 120
      %v1248 = vpop.permute.xlu0 %1247
      %v1249 = vsel %vm1168, %v1246, 0
      %v1251 = vsel %vm1172, %v1248, 0
      %1253 = vmatprep.subr.mxu0 0.0
      %1254 = vmatpush1.msra.mxu0 %v1251
      %1255 = vmatprep.subr.mxu0 0.0
      %1256 = vmatpush1.msra.mxu0 0.0
      %1257 = vmatprep.subr.mxu0 0.0
      %1258 = vmatpush1.msra.mxu0 0.0
      %1259 = vmatprep.subr.mxu0 0.0
      %1260 = vmatpush1.msra.mxu0 0.0
      %1261 = vmatprep.subr.mxu0 0.0
      %1262 = vmatpush1.msra.mxu0 0.0
      %1263 = vmatprep.subr.mxu0 0.0
      %1264 = vmatpush1.msra.mxu0 0.0
      %1265 = vmatprep.subr.mxu0 0.0
      %1266 = vmatpush1.msra.mxu0 0.0
      %1267 = vmatprep.subr.mxu0 0.0
      %1268 = vmatpush1.msra.mxu0 0.0
      %1269 = vmatprep.subr.mxu0 0.0
      %1270 = vmatpush1.msra.mxu0 0.0
      %1271 = vmatprep.subr.mxu0 0.0
      %1272 = vmatpush1.msra.mxu0 0.0
      %1273 = vmatprep.subr.mxu0 0.0
      %1274 = vmatpush1.msra.mxu0 0.0
      %1275 = vmatprep.subr.mxu0 0.0
      %1276 = vmatpush1.msra.mxu0 0.0
      %1277 = vmatprep.subr.mxu0 0.0
      %1278 = vmatpush1.msra.mxu0 0.0
      %1279 = vmatprep.subr.mxu0 0.0
      %1280 = vmatpush1.msra.mxu0 0.0
      %1281 = vmatprep.subr.mxu0 0.0
      %1282 = vmatpush1.msra.mxu0 0.0
      %1283 = vmatprep.subr.mxu0 0.0
      %1284 = vmatpush1.msra.mxu0 0.0
      %1285 = vmatprep.subr.mxu0 0.0
      %1286 = vmatpush1.msra.mxu0 0.0
      %1287 = vmatprep.subr.mxu0 0.0
      %1288 = vmatpush1.msra.mxu0 0.0
      %1289 = vmatprep.subr.mxu0 0.0
      %1290 = vmatpush1.msra.mxu0 0.0
      %1291 = vmatprep.subr.mxu0 0.0
      %1292 = vmatpush1.msra.mxu0 0.0
      %1293 = vmatprep.subr.mxu0 0.0
      %1294 = vmatpush1.msra.mxu0 0.0
      %1295 = vmatprep.subr.mxu0 0.0
      %1296 = vmatpush1.msra.mxu0 0.0
      %1297 = vmatprep.subr.mxu0 0.0
      %1298 = vmatpush1.msra.mxu0 0.0
      %1299 = vmatprep.subr.mxu0 0.0
      %1300 = vmatpush1.msra.mxu0 0.0
      %1301 = vmatprep.subr.mxu0 0.0
      %1302 = vmatpush1.msra.mxu0 0.0
      %1303 = vmatprep.subr.mxu0 0.0
      %1304 = vmatpush1.msra.mxu0 0.0
      %1305 = vmatprep.subr.mxu0 0.0
      %1306 = vmatpush1.msra.mxu0 0.0
      %1307 = vmatprep.subr.mxu0 0.0
      %1308 = vmatpush1.msra.mxu0 0.0
      %1309 = vmatprep.subr.mxu0 0.0
      %1310 = vmatpush1.msra.mxu0 0.0
      %1311 = vmatprep.subr.mxu0 0.0
      %1312 = vmatpush1.msra.mxu0 0.0
      %1313 = vmatprep.subr.mxu0 0.0
      %1314 = vmatpush1.msra.mxu0 0.0
      %1315 = vmatprep.subr.mxu0 0.0
      %1316 = vmatpush1.msra.mxu0 0.0
      %1317 = vmatprep.mubr.f32.mxu0 0.0
      %1318 = vmatmul.mubr.f32.gmra.mrb[0].mxu0 %v1249
      %v1319 = vpop.f32.mrb[0].mxu0
      %v1320 = vadd.f32 0.0, %v1319
      %v1321 = vpop.f32.mrb[0].mxu0
      %1322 = vdwg.mxu0
      %v1323 = vrot.slane %v1167, 2
      %1324 = vrot.lane.b32.xlu0 %v814, 112
      %v1325 = vpop.permute.xlu0 %1324
      %v1326 = vsel %vm1168, %v1323, 0
      %v1328 = vsel %vm1172, %v1325, 0
      %1330 = vmatprep.subr.mxu0 0.0
      %1331 = vmatpush1.msra.mxu0 %v1328
      %1332 = vmatprep.subr.mxu0 0.0
      %1333 = vmatpush1.msra.mxu0 0.0
      %1334 = vmatprep.subr.mxu0 0.0
      %1335 = vmatpush1.msra.mxu0 0.0
      %1336 = vmatprep.subr.mxu0 0.0
      %1337 = vmatpush1.msra.mxu0 0.0
      %1338 = vmatprep.subr.mxu0 0.0
      %1339 = vmatpush1.msra.mxu0 0.0
      %1340 = vmatprep.subr.mxu0 0.0
      %1341 = vmatpush1.msra.mxu0 0.0
      %1342 = vmatprep.subr.mxu0 0.0
      %1343 = vmatpush1.msra.mxu0 0.0
      %1344 = vmatprep.subr.mxu0 0.0
      %1345 = vmatpush1.msra.mxu0 0.0
      %1346 = vmatprep.subr.mxu0 0.0
      %1347 = vmatpush1.msra.mxu0 0.0
      %1348 = vmatprep.subr.mxu0 0.0
      %1349 = vmatpush1.msra.mxu0 0.0
      %1350 = vmatprep.subr.mxu0 0.0
      %1351 = vmatpush1.msra.mxu0 0.0
      %1352 = vmatprep.subr.mxu0 0.0
      %1353 = vmatpush1.msra.mxu0 0.0
      %1354 = vmatprep.subr.mxu0 0.0
      %1355 = vmatpush1.msra.mxu0 0.0
      %1356 = vmatprep.subr.mxu0 0.0
      %1357 = vmatpush1.msra.mxu0 0.0
      %1358 = vmatprep.subr.mxu0 0.0
      %1359 = vmatpush1.msra.mxu0 0.0
      %1360 = vmatprep.subr.mxu0 0.0
      %1361 = vmatpush1.msra.mxu0 0.0
      %1362 = vmatprep.subr.mxu0 0.0
      %1363 = vmatpush1.msra.mxu0 0.0
      %1364 = vmatprep.subr.mxu0 0.0
      %1365 = vmatpush1.msra.mxu0 0.0
      %1366 = vmatprep.subr.mxu0 0.0
      %1367 = vmatpush1.msra.mxu0 0.0
      %1368 = vmatprep.subr.mxu0 0.0
      %1369 = vmatpush1.msra.mxu0 0.0
      %1370 = vmatprep.subr.mxu0 0.0
      %1371 = vmatpush1.msra.mxu0 0.0
      %1372 = vmatprep.subr.mxu0 0.0
      %1373 = vmatpush1.msra.mxu0 0.0
      %1374 = vmatprep.subr.mxu0 0.0
      %1375 = vmatpush1.msra.mxu0 0.0
      %1376 = vmatprep.subr.mxu0 0.0
      %1377 = vmatpush1.msra.mxu0 0.0
      %1378 = vmatprep.subr.mxu0 0.0
      %1379 = vmatpush1.msra.mxu0 0.0
      %1380 = vmatprep.subr.mxu0 0.0
      %1381 = vmatpush1.msra.mxu0 0.0
      %1382 = vmatprep.subr.mxu0 0.0
      %1383 = vmatpush1.msra.mxu0 0.0
      %1384 = vmatprep.subr.mxu0 0.0
      %1385 = vmatpush1.msra.mxu0 0.0
      %1386 = vmatprep.subr.mxu0 0.0
      %1387 = vmatpush1.msra.mxu0 0.0
      %1388 = vmatprep.subr.mxu0 0.0
      %1389 = vmatpush1.msra.mxu0 0.0
      %1390 = vmatprep.subr.mxu0 0.0
      %1391 = vmatpush1.msra.mxu0 0.0
      %1392 = vmatprep.subr.mxu0 0.0
      %1393 = vmatpush1.msra.mxu0 0.0
      %1394 = vmatprep.mubr.f32.mxu0 0.0
      %1395 = vmatmul.mubr.f32.gmra.mrb[0].mxu0 %v1326
      %v1396 = vpop.f32.mrb[0].mxu0
      %v1397 = vadd.f32 0.0, %v1396
      %v1398 = vpop.f32.mrb[0].mxu0
      %1399 = vdwg.mxu0
      %v1400 = vrot.slane %v1167, 3
      %1401 = vrot.lane.b32.xlu0 %v814, 104
      %v1402 = vpop.permute.xlu0 %1401
      %v1403 = vsel %vm1168, %v1400, 0
      %v1405 = vsel %vm1172, %v1402, 0
      %1407 = vmatprep.subr.mxu0 0.0
      %1408 = vmatpush1.msra.mxu0 %v1405
      %1409 = vmatprep.subr.mxu0 0.0
      %1410 = vmatpush1.msra.mxu0 0.0
      %1411 = vmatprep.subr.mxu0 0.0
      %1412 = vmatpush1.msra.mxu0 0.0
      %1413 = vmatprep.subr.mxu0 0.0
      %1414 = vmatpush1.msra.mxu0 0.0
      %1415 = vmatprep.subr.mxu0 0.0
      %1416 = vmatpush1.msra.mxu0 0.0
      %1417 = vmatprep.subr.mxu0 0.0
      %1418 = vmatpush1.msra.mxu0 0.0
      %1419 = vmatprep.subr.mxu0 0.0
      %1420 = vmatpush1.msra.mxu0 0.0
      %1421 = vmatprep.subr.mxu0 0.0
      %1422 = vmatpush1.msra.mxu0 0.0
      %1423 = vmatprep.subr.mxu0 0.0
      %1424 = vmatpush1.msra.mxu0 0.0
      %1425 = vmatprep.subr.mxu0 0.0
      %1426 = vmatpush1.msra.mxu0 0.0
      %1427 = vmatprep.subr.mxu0 0.0
      %1428 = vmatpush1.msra.mxu0 0.0
      %1429 = vmatprep.subr.mxu0 0.0
      %1430 = vmatpush1.msra.mxu0 0.0
      %1431 = vmatprep.subr.mxu0 0.0
      %1432 = vmatpush1.msra.mxu0 0.0
      %1433 = vmatprep.subr.mxu0 0.0
      %1434 = vmatpush1.msra.mxu0 0.0
      %1435 = vmatprep.subr.mxu0 0.0
      %1436 = vmatpush1.msra.mxu0 0.0
      %1437 = vmatprep.subr.mxu0 0.0
      %1438 = vmatpush1.msra.mxu0 0.0
      %1439 = vmatprep.subr.mxu0 0.0
      %1440 = vmatpush1.msra.mxu0 0.0
      %1441 = vmatprep.subr.mxu0 0.0
      %1442 = vmatpush1.msra.mxu0 0.0
      %1443 = vmatprep.subr.mxu0 0.0
      %1444 = vmatpush1.msra.mxu0 0.0
      %1445 = vmatprep.subr.mxu0 0.0
      %1446 = vmatpush1.msra.mxu0 0.0
      %1447 = vmatprep.subr.mxu0 0.0
      %1448 = vmatpush1.msra.mxu0 0.0
      %1449 = vmatprep.subr.mxu0 0.0
      %1450 = vmatpush1.msra.mxu0 0.0
      %1451 = vmatprep.subr.mxu0 0.0
      %1452 = vmatpush1.msra.mxu0 0.0
      %1453 = vmatprep.subr.mxu0 0.0
      %1454 = vmatpush1.msra.mxu0 0.0
      %1455 = vmatprep.subr.mxu0 0.0
      %1456 = vmatpush1.msra.mxu0 0.0
      %1457 = vmatprep.subr.mxu0 0.0
      %1458 = vmatpush1.msra.mxu0 0.0
      %1459 = vmatprep.subr.mxu0 0.0
      %1460 = vmatpush1.msra.mxu0 0.0
      %1461 = vmatprep.subr.mxu0 0.0
      %1462 = vmatpush1.msra.mxu0 0.0
      %1463 = vmatprep.subr.mxu0 0.0
      %1464 = vmatpush1.msra.mxu0 0.0
      %1465 = vmatprep.subr.mxu0 0.0
      %1466 = vmatpush1.msra.mxu0 0.0
      %1467 = vmatprep.subr.mxu0 0.0
      %1468 = vmatpush1.msra.mxu0 0.0
      %1469 = vmatprep.subr.mxu0 0.0
      %1470 = vmatpush1.msra.mxu0 0.0
      %1471 = vmatprep.mubr.f32.mxu0 0.0
      %1472 = vmatmul.mubr.f32.gmra.mrb[0].mxu0 %v1403
      %v1473 = vpop.f32.mrb[0].mxu0
      %v1474 = vadd.f32 0.0, %v1473
      %v1475 = vpop.f32.mrb[0].mxu0
      %1476 = vdwg.mxu0
      %1478 = vrot.lane.b32.xlu0 %v1320, 8
      %v1479 = vpop.permute.xlu0 %1478
      %1482 = vrot.lane.b32.xlu0 %v1397, 16
      %v1483 = vpop.permute.xlu0 %1482
      %1486 = vrot.lane.b32.xlu0 %v1474, 24
      %v1487 = vpop.permute.xlu0 %1486
      %v1489 = vsel %vm815, %v1243, %v1479
      %vm1490 = vcmask 130048
      %v1491 = vsel %vm1490, %v1489, %v1483
      %vm1492 = vcmask 195584
      %v1493 = vsel %vm1492, %v1491, %v1487
      %v1494 = vld [vmem:[%s21] sm:$0xff]
      %v1495 = vld [vmem:[%s21 + $0x8] sm:$0xff]
      %v1496 = vld [vmem:[%s21 + $0x10] sm:$0xff]
      %v1497 = vld [vmem:[%s21 + $0x18] sm:$0xff]
      %v1498 = vld [vmem:[%s23] sm:$0x1]
      %v1500 = vsel %vm548, %v1493, 0
      %1502 = vmatprep.subr.mxu0 0.0
      %1503 = vmatpush1.msra.mxu0 %v1494
      %1504 = vmatprep.subr.mxu0 0.0
      %1505 = vmatpush1.msra.mxu0 %v1495
      %1506 = vmatprep.subr.mxu0 0.0
      %1507 = vmatpush1.msra.mxu0 %v1496
      %1508 = vmatprep.subr.mxu0 0.0
      %1509 = vmatpush1.msra.mxu0 %v1497
      %1510 = vmatprep.subr.mxu0 0.0
      %1511 = vmatpush1.msra.mxu0 0.0
      %1512 = vmatprep.subr.mxu0 0.0
      %1513 = vmatpush1.msra.mxu0 0.0
      %1514 = vmatprep.subr.mxu0 0.0
      %1515 = vmatpush1.msra.mxu0 0.0
      %1516 = vmatprep.subr.mxu0 0.0
      %1517 = vmatpush1.msra.mxu0 0.0
      %1518 = vmatprep.subr.mxu0 0.0
      %1519 = vmatpush1.msra.mxu0 0.0
      %1520 = vmatprep.subr.mxu0 0.0
      %1521 = vmatpush1.msra.mxu0 0.0
      %1522 = vmatprep.subr.mxu0 0.0
      %1523 = vmatpush1.msra.mxu0 0.0
      %1524 = vmatprep.subr.mxu0 0.0
      %1525 = vmatpush1.msra.mxu0 0.0
      %1526 = vmatprep.subr.mxu0 0.0
      %1527 = vmatpush1.msra.mxu0 0.0
      %1528 = vmatprep.subr.mxu0 0.0
      %1529 = vmatpush1.msra.mxu0 0.0
      %1530 = vmatprep.subr.mxu0 0.0
      %1531 = vmatpush1.msra.mxu0 0.0
      %1532 = vmatprep.subr.mxu0 0.0
      %1533 = vmatpush1.msra.mxu0 0.0
      %1534 = vmatprep.subr.mxu0 0.0
      %1535 = vmatpush1.msra.mxu0 0.0
      %1536 = vmatprep.subr.mxu0 0.0
      %1537 = vmatpush1.msra.mxu0 0.0
      %1538 = vmatprep.subr.mxu0 0.0
      %1539 = vmatpush1.msra.mxu0 0.0
      %1540 = vmatprep.subr.mxu0 0.0
      %1541 = vmatpush1.msra.mxu0 0.0
      %1542 = vmatprep.subr.mxu0 0.0
      %1543 = vmatpush1.msra.mxu0 0.0
      %1544 = vmatprep.subr.mxu0 0.0
      %1545 = vmatpush1.msra.mxu0 0.0
      %1546 = vmatprep.subr.mxu0 0.0
      %1547 = vmatpush1.msra.mxu0 0.0
      %1548 = vmatprep.subr.mxu0 0.0
      %1549 = vmatpush1.msra.mxu0 0.0
      %1550 = vmatprep.subr.mxu0 0.0
      %1551 = vmatpush1.msra.mxu0 0.0
      %1552 = vmatprep.subr.mxu0 0.0
      %1553 = vmatpush1.msra.mxu0 0.0
      %1554 = vmatprep.subr.mxu0 0.0
      %1555 = vmatpush1.msra.mxu0 0.0
      %1556 = vmatprep.subr.mxu0 0.0
      %1557 = vmatpush1.msra.mxu0 0.0
      %1558 = vmatprep.subr.mxu0 0.0
      %1559 = vmatpush1.msra.mxu0 0.0
      %1560 = vmatprep.subr.mxu0 0.0
      %1561 = vmatpush1.msra.mxu0 0.0
      %1562 = vmatprep.subr.mxu0 0.0
      %1563 = vmatpush1.msra.mxu0 0.0
      %1564 = vmatprep.subr.mxu0 0.0
      %1565 = vmatpush1.msra.mxu0 0.0
      %1566 = vmatprep.mubr.f32.mxu0 0.0
      %1567 = vmatmul.mubr.f32.gmra.mrb[0].mxu0 %v1500
      %v1568 = vpop.f32.mrb[0].mxu0
      %v1569 = vadd.f32 %v1498, %v1568
      %v1570 = vpop.f32.mrb[0].mxu0
      %1571 = vdwg.mxu0
      %v1572 = vadd.f32 %v723, %v1569
      %v1573 = vld [vmem:[%s33] sm:$0x1]
      %v1574 = vld [vmem:[%s35] sm:$0x1]
      %v1575 = vsel %vm207, %v1572, 0.0
      %1576 = vadd.xlane.f32.xlu0 %v1575
      %v1577 = vpop.xlane.xlu0 %1576
      %v1578 = vrcp.pop 32.0
      %v1579 = vmul.f32 %v1577, %v1578
      %v1580 = vsub.f32 %v1572, %v1579
      %v1581 = vmul.f32 %v1580, %v1580
      %v1582 = vsel %vm207, %v1581, 0.0
      %1583 = vadd.xlane.f32.xlu0 %v1582
      %v1584 = vpop.xlane.xlu0 %1583
      %v1585 = vmul.f32 %v1584, %v1578
      %v1586 = vadd.f32 %v1585, 1e-05
      %v1587 = vrsqrt.pop %v1586
      %v1588 = vmul.f32 %v1580, %v1587
      %v1589 = vmul.f32 %v1588, %v1573
      %v1590 = vadd.f32 %v1589, %v1574
      %s1591 = scalar_lea.vmem [#allocation4], %s715
      %v1592 = vld [vmem:[%s1591] sm:$0x1]
      %v1593 = vadd.f32 %v1590, %v1592
      %v1594 = vld [vmem:[%s37] sm:$0x1]
      %v1595 = vld [vmem:[%s39] sm:$0x1]
      %v1596 = vsel %vm207, %v1593, 0.0
      %1597 = vadd.xlane.f32.xlu0 %v1596
      %v1598 = vpop.xlane.xlu0 %1597
      %v1599 = vmul.f32 %v1598, %v1578
      %v1600 = vsub.f32 %v1593, %v1599
      %v1601 = vmul.f32 %v1600, %v1600
      %v1602 = vsel %vm207, %v1601, 0.0
      %1603 = vadd.xlane.f32.xlu0 %v1602
      %v1604 = vpop.xlane.xlu0 %1603
      %v1605 = vmul.f32 %v1604, %v1578
      %v1606 = vadd.f32 %v1605, 1e-05
      %v1607 = vrsqrt.pop %v1606
      %v1608 = vmul.f32 %v1600, %v1607
      %v1609 = vmul.f32 %v1608, %v1594
      %v1610 = vadd.f32 %v1609, %v1595
      %v1611 = vld [vmem:[%s45] sm:$0xff]
      %v1612 = vld [vmem:[%s45 + $0x8] sm:$0xff]
      %v1613 = vld [vmem:[%s45 + $0x10] sm:$0xff]
      %v1614 = vld [vmem:[%s45 + $0x18] sm:$0xff]
      %v1615 = vld [vmem:[%s47] sm:$0x1]
      %v1617 = vsel %vm548, %v1610, 0
      %1619 = vmatprep.subr.mxu0 0.0
      %1620 = vmatpush1.msra.mxu0 %v1611
      %1621 = vmatprep.subr.mxu0 0.0
      %1622 = vmatpush1.msra.mxu0 %v1612
      %1623 = vmatprep.subr.mxu0 0.0
      %1624 = vmatpush1.msra.mxu0 %v1613
      %1625 = vmatprep.subr.mxu0 0.0
      %1626 = vmatpush1.msra.mxu0 %v1614
      %1627 = vmatprep.subr.mxu0 0.0
      %1628 = vmatpush1.msra.mxu0 0.0
      %1629 = vmatprep.subr.mxu0 0.0
      %1630 = vmatpush1.msra.mxu0 0.0
      %1631 = vmatprep.subr.mxu0 0.0
      %1632 = vmatpush1.msra.mxu0 0.0
      %1633 = vmatprep.subr.mxu0 0.0
      %1634 = vmatpush1.msra.mxu0 0.0
      %1635 = vmatprep.subr.mxu0 0.0
      %1636 = vmatpush1.msra.mxu0 0.0
      %1637 = vmatprep.subr.mxu0 0.0
      %1638 = vmatpush1.msra.mxu0 0.0
      %1639 = vmatprep.subr.mxu0 0.0
      %1640 = vmatpush1.msra.mxu0 0.0
      %1641 = vmatprep.subr.mxu0 0.0
      %1642 = vmatpush1.msra.mxu0 0.0
      %1643 = vmatprep.subr.mxu0 0.0
      %1644 = vmatpush1.msra.mxu0 0.0
      %1645 = vmatprep.subr.mxu0 0.0
      %1646 = vmatpush1.msra.mxu0 0.0
      %1647 = vmatprep.subr.mxu0 0.0
      %1648 = vmatpush1.msra.mxu0 0.0
      %1649 = vmatprep.subr.mxu0 0.0
      %1650 = vmatpush1.msra.mxu0 0.0
      %1651 = vmatprep.subr.mxu0 0.0
      %1652 = vmatpush1.msra.mxu0 0.0
      %1653 = vmatprep.subr.mxu0 0.0
      %1654 = vmatpush1.msra.mxu0 0.0
      %1655 = vmatprep.subr.mxu0 0.0
      %1656 = vmatpush1.msra.mxu0 0.0
      %1657 = vmatprep.subr.mxu0 0.0
      %1658 = vmatpush1.msra.mxu0 0.0
      %1659 = vmatprep.subr.mxu0 0.0
      %1660 = vmatpush1.msra.mxu0 0.0
      %1661 = vmatprep.subr.mxu0 0.0
      %1662 = vmatpush1.msra.mxu0 0.0
      %1663 = vmatprep.subr.mxu0 0.0
      %1664 = vmatpush1.msra.mxu0 0.0
      %1665 = vmatprep.subr.mxu0 0.0
      %1666 = vmatpush1.msra.mxu0 0.0
      %1667 = vmatprep.subr.mxu0 0.0
      %1668 = vmatpush1.msra.mxu0 0.0
      %1669 = vmatprep.subr.mxu0 0.0
      %1670 = vmatpush1.msra.mxu0 0.0
      %1671 = vmatprep.subr.mxu0 0.0
      %1672 = vmatpush1.msra.mxu0 0.0
      %1673 = vmatprep.subr.mxu0 0.0
      %1674 = vmatpush1.msra.mxu0 0.0
      %1675 = vmatprep.subr.mxu0 0.0
      %1676 = vmatpush1.msra.mxu0 0.0
      %1677 = vmatprep.subr.mxu0 0.0
      %1678 = vmatpush1.msra.mxu0 0.0
      %1679 = vmatprep.subr.mxu0 0.0
      %1680 = vmatpush1.msra.mxu0 0.0
      %1681 = vmatprep.subr.mxu0 0.0
      %1682 = vmatpush1.msra.mxu0 0.0
      %1683 = vmatprep.mubr.f32.mxu0 0.0
      %1684 = vmatmul.mubr.f32.gmra.mrb[0].mxu0 %v1617
      %v1685 = vpop.f32.mrb[0].mxu0
      %v1686 = vadd.f32 %v1615, %v1685
      %v1687 = vpop.f32.mrb[0].mxu0
      %1688 = vdwg.mxu0
      %v1689 = vmax.f32 %v1686, 0.0
      %v1690 = vld [vmem:[%s49] sm:$0xff]
      %v1691 = vld [vmem:[%s49 + $0x8] sm:$0xff]
      %v1692 = vld [vmem:[%s49 + $0x10] sm:$0xff]
      %v1693 = vld [vmem:[%s49 + $0x18] sm:$0xff]
      %v1694 = vld [vmem:[%s49 + $0x20] sm:$0xff]
      %v1695 = vld [vmem:[%s49 + $0x28] sm:$0xff]
      %v1696 = vld [vmem:[%s49 + $0x30] sm:$0xff]
      %v1697 = vld [vmem:[%s49 + $0x38] sm:$0xff]
      %v1698 = vld [vmem:[%s51] sm:$0x1]
      %vm1699 = vcmask 523264
      %v1701 = vsel %vm1699, %v1689, 0
      %1703 = vmatprep.subr.mxu0 0.0
      %1704 = vmatpush1.msra.mxu0 %v1690
      %1705 = vmatprep.subr.mxu0 0.0
      %1706 = vmatpush1.msra.mxu0 %v1691
      %1707 = vmatprep.subr.mxu0 0.0
      %1708 = vmatpush1.msra.mxu0 %v1692
      %1709 = vmatprep.subr.mxu0 0.0
      %1710 = vmatpush1.msra.mxu0 %v1693
      %1711 = vmatprep.subr.mxu0 0.0
      %1712 = vmatpush1.msra.mxu0 %v1694
      %1713 = vmatprep.subr.mxu0 0.0
      %1714 = vmatpush1.msra.mxu0 %v1695
      %1715 = vmatprep.subr.mxu0 0.0
      %1716 = vmatpush1.msra.mxu0 %v1696
      %1717 = vmatprep.subr.mxu0 0.0
      %1718 = vmatpush1.msra.mxu0 %v1697
      %1719 = vmatprep.subr.mxu0 0.0
      %1720 = vmatpush1.msra.mxu0 0.0
      %1721 = vmatprep.subr.mxu0 0.0
      %1722 = vmatpush1.msra.mxu0 0.0
      %1723 = vmatprep.subr.mxu0 0.0
      %1724 = vmatpush1.msra.mxu0 0.0
      %1725 = vmatprep.subr.mxu0 0.0
      %1726 = vmatpush1.msra.mxu0 0.0
      %1727 = vmatprep.subr.mxu0 0.0
      %1728 = vmatpush1.msra.mxu0 0.0
      %1729 = vmatprep.subr.mxu0 0.0
      %1730 = vmatpush1.msra.mxu0 0.0
      %1731 = vmatprep.subr.mxu0 0.0
      %1732 = vmatpush1.msra.mxu0 0.0
      %1733 = vmatprep.subr.mxu0 0.0
      %1734 = vmatpush1.msra.mxu0 0.0
      %1735 = vmatprep.subr.mxu0 0.0
      %1736 = vmatpush1.msra.mxu0 0.0
      %1737 = vmatprep.subr.mxu0 0.0
      %1738 = vmatpush1.msra.mxu0 0.0
      %1739 = vmatprep.subr.mxu0 0.0
      %1740 = vmatpush1.msra.mxu0 0.0
      %1741 = vmatprep.subr.mxu0 0.0
      %1742 = vmatpush1.msra.mxu0 0.0
      %1743 = vmatprep.subr.mxu0 0.0
      %1744 = vmatpush1.msra.mxu0 0.0
      %1745 = vmatprep.subr.mxu0 0.0
      %1746 = vmatpush1.msra.mxu0 0.0
      %1747 = vmatprep.subr.mxu0 0.0
      %1748 = vmatpush1.msra.mxu0 0.0
      %1749 = vmatprep.subr.mxu0 0.0
      %1750 = vmatpush1.msra.mxu0 0.0
      %1751 = vmatprep.subr.mxu0 0.0
      %1752 = vmatpush1.msra.mxu0 0.0
      %1753 = vmatprep.subr.mxu0 0.0
      %1754 = vmatpush1.msra.mxu0 0.0
      %1755 = vmatprep.subr.mxu0 0.0
      %1756 = vmatpush1.msra.mxu0 0.0
      %1757 = vmatprep.subr.mxu0 0.0
      %1758 = vmatpush1.msra.mxu0 0.0
      %1759 = vmatprep.subr.mxu0 0.0
      %1760 = vmatpush1.msra.mxu0 0.0
      %1761 = vmatprep.subr.mxu0 0.0
      %1762 = vmatpush1.msra.mxu0 0.0
      %1763 = vmatprep.subr.mxu0 0.0
      %1764 = vmatpush1.msra.mxu0 0.0
      %1765 = vmatprep.subr.mxu0 0.0
      %1766 = vmatpush1.msra.mxu0 0.0
      %1767 = vmatprep.mubr.f32.mxu0 0.0
      %1768 = vmatmul.mubr.f32.gmra.mrb[0].mxu0 %v1701
      %v1769 = vpop.f32.mrb[0].mxu0
      %v1770 = vadd.f32 %v1698, %v1769
      %v1771 = vpop.f32.mrb[0].mxu0
      %1772 = vdwg.mxu0
      %v1773 = vadd.f32 %v1610, %v1770
      %v1774 = vld [vmem:[%s41] sm:$0x1]
      %v1775 = vld [vmem:[%s43] sm:$0x1]
      %v1776 = vsel %vm207, %v1773, 0.0
      %1777 = vadd.xlane.f32.xlu0 %v1776
      %v1778 = vpop.xlane.xlu0 %1777
      %v1779 = vmul.f32 %v1778, %v1578
      %v1780 = vsub.f32 %v1773, %v1779
      %v1781 = vmul.f32 %v1780, %v1780
      %v1782 = vsel %vm207, %v1781, 0.0
      %1783 = vadd.xlane.f32.xlu0 %v1782
      %v1784 = vpop.xlane.xlu0 %1783
      %v1785 = vmul.f32 %v1784, %v1578
      %v1786 = vadd.f32 %v1785, 1e-05
      %v1787 = vrsqrt.pop %v1786
      %v1788 = vmul.f32 %v1780, %v1787
      %v1789 = vmul.f32 %v1788, %v1774
      %v1790 = vadd.f32 %v1789, %v1775
      %v1791 = vld [vmem:[%s53] sm:$0xff]
      %v1792 = vld [vmem:[%s53 + $0x8] sm:$0xff]
      %v1793 = vld [vmem:[%s53 + $0x10] sm:$0xff]
      %v1794 = vld [vmem:[%s53 + $0x18] sm:$0xff]
      %v1795 = vld [vmem:[%s55] sm:$0x1]
      %v1797 = vsel %vm548, %v1790, 0
      %1799 = vmatprep.subr.mxu0 0.0
      %1800 = vmatpush1.msra.mxu0 %v1791
      %1801 = vmatprep.subr.mxu0 0.0
      %1802 = vmatpush1.msra.mxu0 %v1792
      %1803 = vmatprep.subr.mxu0 0.0
      %1804 = vmatpush1.msra.mxu0 %v1793
      %1805 = vmatprep.subr.mxu0 0.0
      %1806 = vmatpush1.msra.mxu0 %v1794
      %1807 = vmatprep.subr.mxu0 0.0
      %1808 = vmatpush1.msra.mxu0 0.0
      %1809 = vmatprep.subr.mxu0 0.0
      %1810 = vmatpush1.msra.mxu0 0.0
      %1811 = vmatprep.subr.mxu0 0.0
      %1812 = vmatpush1.msra.mxu0 0.0
      %1813 = vmatprep.subr.mxu0 0.0
      %1814 = vmatpush1.msra.mxu0 0.0
      %1815 = vmatprep.subr.mxu0 0.0
      %1816 = vmatpush1.msra.mxu0 0.0
      %1817 = vmatprep.subr.mxu0 0.0
      %1818 = vmatpush1.msra.mxu0 0.0
      %1819 = vmatprep.subr.mxu0 0.0
      %1820 = vmatpush1.msra.mxu0 0.0
      %1821 = vmatprep.subr.mxu0 0.0
      %1822 = vmatpush1.msra.mxu0 0.0
      %1823 = vmatprep.subr.mxu0 0.0
      %1824 = vmatpush1.msra.mxu0 0.0
      %1825 = vmatprep.subr.mxu0 0.0
      %1826 = vmatpush1.msra.mxu0 0.0
      %1827 = vmatprep.subr.mxu0 0.0
      %1828 = vmatpush1.msra.mxu0 0.0
      %1829 = vmatprep.subr.mxu0 0.0
      %1830 = vmatpush1.msra.mxu0 0.0
      %1831 = vmatprep.subr.mxu0 0.0
      %1832 = vmatpush1.msra.mxu0 0.0
      %1833 = vmatprep.subr.mxu0 0.0
      %1834 = vmatpush1.msra.mxu0 0.0
      %1835 = vmatprep.subr.mxu0 0.0
      %1836 = vmatpush1.msra.mxu0 0.0
      %1837 = vmatprep.subr.mxu0 0.0
      %1838 = vmatpush1.msra.mxu0 0.0
      %1839 = vmatprep.subr.mxu0 0.0
      %1840 = vmatpush1.msra.mxu0 0.0
      %1841 = vmatprep.subr.mxu0 0.0
      %1842 = vmatpush1.msra.mxu0 0.0
      %1843 = vmatprep.subr.mxu0 0.0
      %1844 = vmatpush1.msra.mxu0 0.0
      %1845 = vmatprep.subr.mxu0 0.0
      %1846 = vmatpush1.msra.mxu0 0.0
      %1847 = vmatprep.subr.mxu0 0.0
      %1848 = vmatpush1.msra.mxu0 0.0
      %1849 = vmatprep.subr.mxu0 0.0
      %1850 = vmatpush1.msra.mxu0 0.0
      %1851 = vmatprep.subr.mxu0 0.0
      %1852 = vmatpush1.msra.mxu0 0.0
      %1853 = vmatprep.subr.mxu0 0.0
      %1854 = vmatpush1.msra.mxu0 0.0
      %1855 = vmatprep.subr.mxu0 0.0
      %1856 = vmatpush1.msra.mxu0 0.0
      %1857 = vmatprep.subr.mxu0 0.0
      %1858 = vmatpush1.msra.mxu0 0.0
      %1859 = vmatprep.subr.mxu0 0.0
      %1860 = vmatpush1.msra.mxu0 0.0
      %1861 = vmatprep.subr.mxu0 0.0
      %1862 = vmatpush1.msra.mxu0 0.0
      %1863 = vmatprep.mubr.f32.mxu0 0.0
      %1864 = vmatmul.mubr.f32.gmra.mrb[0].mxu0 %v1797
      %v1865 = vpop.f32.mrb[0].mxu0
      %v1866 = vadd.f32 %v1795, %v1865
      %v1867 = vpop.f32.mrb[0].mxu0
      %1868 = vdwg.mxu0
      %v1869 = vadd.f32 %v1866, %v713
      %s1870 = scalar_lea.vmem [#allocation7], %s715
      %vm1871 = vcmask 90112
      %1872 = vst.msk [vmem:[%s1870] sm:$0x1] %vm1871, %v1869
      %v1873 = vld [vmem:[%s57] sm:$0xff]
      %v1874 = vld [vmem:[%s57 + $0x8] sm:$0xff]
      %v1875 = vld [vmem:[%s57 + $0x10] sm:$0xff]
      %v1876 = vld [vmem:[%s57 + $0x18] sm:$0xff]
      %v1877 = vld [vmem:[#allocation3] sm:$0x1]
      %1878 = vmatprep.subr.mxu0 0.0
      %1879 = vmatpush1.msra.mxu0 %v1873
      %1880 = vmatprep.subr.mxu0 0.0
      %1881 = vmatpush1.msra.mxu0 %v1874
      %1882 = vmatprep.subr.mxu0 0.0
      %1883 = vmatpush1.msra.mxu0 %v1875
      %1884 = vmatprep.subr.mxu0 0.0
      %1885 = vmatpush1.msra.mxu0 %v1876
      %1886 = vmatprep.subr.mxu0 0.0
      %1887 = vmatpush1.msra.mxu0 0.0
      %1888 = vmatprep.subr.mxu0 0.0
      %1889 = vmatpush1.msra.mxu0 0.0
      %1890 = vmatprep.subr.mxu0 0.0
      %1891 = vmatpush1.msra.mxu0 0.0
      %1892 = vmatprep.subr.mxu0 0.0
      %1893 = vmatpush1.msra.mxu0 0.0
      %1894 = vmatprep.subr.mxu0 0.0
      %1895 = vmatpush1.msra.mxu0 0.0
      %1896 = vmatprep.subr.mxu0 0.0
      %1897 = vmatpush1.msra.mxu0 0.0
      %1898 = vmatprep.subr.mxu0 0.0
      %1899 = vmatpush1.msra.mxu0 0.0
      %1900 = vmatprep.subr.mxu0 0.0
      %1901 = vmatpush1.msra.mxu0 0.0
      %1902 = vmatprep.subr.mxu0 0.0
      %1903 = vmatpush1.msra.mxu0 0.0
      %1904 = vmatprep.subr.mxu0 0.0
      %1905 = vmatpush1.msra.mxu0 0.0
      %1906 = vmatprep.subr.mxu0 0.0
      %1907 = vmatpush1.msra.mxu0 0.0
      %1908 = vmatprep.subr.mxu0 0.0
      %1909 = vmatpush1.msra.mxu0 0.0
      %1910 = vmatprep.subr.mxu0 0.0
      %1911 = vmatpush1.msra.mxu0 0.0
      %1912 = vmatprep.subr.mxu0 0.0
      %1913 = vmatpush1.msra.mxu0 0.0
      %1914 = vmatprep.subr.mxu0 0.0
      %1915 = vmatpush1.msra.mxu0 0.0
      %1916 = vmatprep.subr.mxu0 0.0
      %1917 = vmatpush1.msra.mxu0 0.0
      %1918 = vmatprep.subr.mxu0 0.0
      %1919 = vmatpush1.msra.mxu0 0.0
      %1920 = vmatprep.subr.mxu0 0.0
      %1921 = vmatpush1.msra.mxu0 0.0
      %1922 = vmatprep.subr.mxu0 0.0
      %1923 = vmatpush1.msra.mxu0 0.0
      %1924 = vmatprep.subr.mxu0 0.0
      %1925 = vmatpush1.msra.mxu0 0.0
      %1926 = vmatprep.subr.mxu0 0.0
      %1927 = vmatpush1.msra.mxu0 0.0
      %1928 = vmatprep.subr.mxu0 0.0
      %1929 = vmatpush1.msra.mxu0 0.0
      %1930 = vmatprep.subr.mxu0 0.0
      %1931 = vmatpush1.msra.mxu0 0.0
      %1932 = vmatprep.subr.mxu0 0.0
      %1933 = vmatpush1.msra.mxu0 0.0
      %1934 = vmatprep.subr.mxu0 0.0
      %1935 = vmatpush1.msra.mxu0 0.0
      %1936 = vmatprep.subr.mxu0 0.0
      %1937 = vmatpush1.msra.mxu0 0.0
      %1938 = vmatprep.subr.mxu0 0.0
      %1939 = vmatpush1.msra.mxu0 0.0
      %1940 = vmatprep.subr.mxu0 0.0
      %1941 = vmatpush1.msra.mxu0 0.0
      %1942 = vmatprep.mubr.f32.mxu0 0.0
      %1943 = vmatmul.mubr.f32.gmra.mrb[0].mxu0 %v1797
      %v1944 = vpop.f32.mrb[0].mxu0
      %v1945 = vadd.f32 %v1877, %v1944
      %v1946 = vpop.f32.mrb[0].mxu0
      %1947 = vdwg.mxu0
      %1948 = vst.msk [vmem:[#allocation2] sm:$0x1] %vm207, %v1945
    $region126: #{faceformer_forward.1} parent=1 // loop_footer
      %s719 = sadd.s32 1, %s715
    $region127: #{faceformer_forward.1} parent=1 // loop_footer_branch
      %714 = sbr.rel target = $region123
    $region128: #{faceformer_forward.1} parent=1 // loop_exit
      _
    // Predicated region
    $region129: #{faceformer_forward.1} parent=1 // pred_check
      _
    $region130: #{faceformer_forward.1} parent=1 // pred_check_branch
      %1950 = sbr.rel (0) target = $region132
    $region131: #{faceformer_forward.1} parent=1 // pred_region
      %s1952 = ssub.s32 64, 64
      %1953 = vsyncadd [#allocation8], %s1952
      %s1955 = sshll.u32 [#allocation7], 4
      %s1956 = int_to_ptr.vmem [resolvable:$true] %s1955
      %1958 = dma.vmem_to_hbm [thread:$0]  %s1956, 64, %s61, [#allocation8]
    $region132: #{faceformer_forward.1} parent=1 // pred_fallthru
      _
    // Predicated region
    $region133: #{faceformer_forward.1} parent=1 // pred_check
      _
    $region134: #{faceformer_forward.1} parent=1 // pred_check_branch
      %1960 = sbr.rel (0) target = $region136
    $region135: #{faceformer_forward.1} parent=1 // pred_region
      %1961 = dma.done [#allocation8], 64
    $region136: #{faceformer_forward.1} parent=1 // pred_fallthru
      _
    %1962 = vsyncpa [#allocation8], 1

</llo_original>
